<compile_context>
chip_gen: v6e
topology: v6e:2x2x1
jax: 0.10.0
libtpu: 0.0.40
codegen_flags: <defaults>
</compile_context>

<pallas_src>
import math
import functools

import jax
import jax.numpy as jnp
from jax.experimental import pallas as pl
from jax.experimental.pallas import tpu as pltpu

MXU_DTYPE = jnp.bfloat16          # MXU operand dtype (f32 accumulation everywhere)
_VMEM_LIMIT = 32 * 1024 * 1024    # explicit scoped-VMEM budget; safe on v5e/v6e/v7x


def _compiler_params(semantics):
    return pltpu.CompilerParams(
        dimension_semantics=semantics,
        vmem_limit_bytes=_VMEM_LIMIT,
    )


def _tile_rows(n, target=256):
    # Token-tile size: full array if small, else 256 rows (multiple of 8; partial
    # trailing blocks are masked on store, and all our row-wise ops are independent
    # per row, so padded garbage rows never leak into valid outputs).
    return n if n <= target else target


def _layernorm_f32(x, scale, shift):
    # x: (M, D) f32; scale/shift: (1, D) f32. unbiased=False variance, eps=1e-5.
    mean = jnp.mean(x, axis=-1, keepdims=True)
    var = jnp.mean((x - mean) ** 2, axis=-1, keepdims=True)
    norm = (x - mean) * jax.lax.rsqrt(var + 1e-5)
    return scale * norm + shift


# ------------------------- kernel 1: LN1 + QKV proj ------------------------- #

def _ln_qkv_kernel(x_ref, scale_ref, shift_ref, wqkv_ref, o_ref):
    x = x_ref[...].astype(jnp.float32)
    h = _layernorm_f32(x, scale_ref[...], shift_ref[...])
    acc = jnp.dot(h.astype(MXU_DTYPE), wqkv_ref[...],
                  preferred_element_type=jnp.float32)
    o_ref[...] = acc.astype(o_ref.dtype)


def ln_qkv(x, scale, shift, wqkv):
    # x: (N, D) f32, wqkv: (D, 3D) bf16 -> (N, 3D) f32
    N, D = x.shape
    D3 = wqkv.shape[1]
    tm = _tile_rows(N)
    return pl.pallas_call(
        _ln_qkv_kernel,
        out_shape=jax.ShapeDtypeStruct((N, D3), x.dtype),
        grid=(pl.cdiv(N, tm),),
        in_specs=[
            pl.BlockSpec((tm, D), lambda i: (i, 0)),
            pl.BlockSpec((1, D), lambda i: (0, 0)),
            pl.BlockSpec((1, D), lambda i: (0, 0)),
            pl.BlockSpec((D, D3), lambda i: (0, 0)),
        ],
        out_specs=pl.BlockSpec((tm, D3), lambda i: (i, 0)),
        compiler_params=_compiler_params(("parallel",)),
    )(x, scale.reshape(1, -1), shift.reshape(1, -1), wqkv)


# ------- kernel 2: multi-head attention + out-proj + residual (per batch) ---- #

def _attn_block_kernel(qkv_ref, wo_ref, bo_ref, x_ref, o_ref, *, n_heads, scale):
    L = qkv_ref.shape[1]
    D = x_ref.shape[2]
    hd = D // n_heads

    qkv = qkv_ref[0].astype(jnp.float32)        # (L, 3D)
    wo = wo_ref[...]                            # (D, D) bf16, loaded once

    # causal mask, built once and shared across heads
    row = jax.lax.broadcasted_iota(jnp.int32, (L, L), 0)
    col = jax.lax.broadcasted_iota(jnp.int32, (L, L), 1)
    causal = col > row

    # residual + out_proj bias folded into the accumulator (fused residual add)
    acc = x_ref[0].astype(jnp.float32) + bo_ref[...].astype(jnp.float32)   # (L, D)

    nt_dims = (((1,), (1,)), ((), ()))          # contract minor dims (q @ k^T)
    for h in range(n_heads):                    # static unroll over heads
        q = qkv[:, h * hd:(h + 1) * hd] * scale                 # scale folded into q
        k = qkv[:, D + h * hd:D + (h + 1) * hd]
        v = qkv[:, 2 * D + h * hd:2 * D + (h + 1) * hd]

        s = jax.lax.dot_general(q.astype(MXU_DTYPE), k.astype(MXU_DTYPE), nt_dims,
                                preferred_element_type=jnp.float32)        # (L, L)
        s = jnp.where(causal, -jnp.inf, s)
        m = jnp.max(s, axis=-1, keepdims=True)
        p = jnp.exp(s - m)
        p = p * pl.reciprocal(jnp.sum(p, axis=-1, keepdims=True), approx=True)

        ctx = jnp.dot(p.astype(MXU_DTYPE), v.astype(MXU_DTYPE),
                      preferred_element_type=jnp.float32)                  # (L, hd)
        # ctx_h @ Wo[h*hd:(h+1)*hd, :] summed over heads == concat(ctx) @ Wo
        acc = acc + jnp.dot(ctx.astype(MXU_DTYPE), wo[h * hd:(h + 1) * hd, :],
                            preferred_element_type=jnp.float32)

    o_ref[0] = acc.astype(o_ref.dtype)          # lane-dense (L, D) store


def attention_block(qkv, x, wo, bo, n_heads):
    # qkv: (N, 3D) f32, x: (B, L, D) f32, wo: (D, D) bf16, bo: (D,) f32
    B, L, D = x.shape
    scale = 1.0 / math.sqrt(D // n_heads)
    qkv3 = qkv.reshape(B, L, 3 * D)
    kernel = functools.partial(_attn_block_kernel, n_heads=n_heads, scale=scale)
    return pl.pallas_call(
        kernel,
        out_shape=jax.ShapeDtypeStruct((B, L, D), x.dtype),
        grid=(B,),
        in_specs=[
            pl.BlockSpec((1, L, 3 * D), lambda b: (b, 0, 0)),
            pl.BlockSpec((D, D), lambda b: (0, 0)),
            pl.BlockSpec((1, D), lambda b: (0, 0)),
            pl.BlockSpec((1, L, D), lambda b: (b, 0, 0)),
        ],
        out_specs=pl.BlockSpec((1, L, D), lambda b: (b, 0, 0)),
        compiler_params=_compiler_params(("parallel",)),
    )(qkv3, wo, bo.reshape(1, -1), x)


# -------------- kernel 3: LN2 + RBF features + FF linear + residual ---------- #

def _ln_rbf_ff_kernel(x_ref, scale_ref, shift_ref, inv_ls_ref, cs_t_ref, c2_ref,
                      ff_w_ref, ff_b_ref, o_ref):
    x = x_ref[...].astype(jnp.float32)
    h = _layernorm_f32(x, scale_ref[...], shift_ref[...])
    hs = h * inv_ls_ref[...]                                     # ARD scaling
    x2 = jnp.sum(hs * hs, axis=-1, keepdims=True)                # (TM, 1)
    # centers already ARD-scaled and transposed outside the kernel; keep the
    # distance cross-term in f32 (precision-sensitive cancellation).
    cross = jnp.dot(hs, cs_t_ref[...], preferred_element_type=jnp.float32)  # (TM, Kc)
    d2 = jnp.maximum(x2 + c2_ref[...] - 2.0 * cross, 0.0)        # gpytorch clamps at 0
    rbf = jnp.exp(-0.5 * d2)
    ff = jnp.dot(rbf.astype(MXU_DTYPE), ff_w_ref[...],
                 preferred_element_type=jnp.float32)
    o_ref[...] = (x + ff + ff_b_ref[...]).astype(o_ref.dtype)    # fused residual add


def ln_rbf_ff(x, scale, shift, inv_ls, centers_scaled_t, c2, ff_w, ff_b):
    # x: (N, D) f32; centers_scaled_t: (D, Kc) f32; c2: (1, Kc) f32; ff_w: (Kc, D) bf16
    N, D = x.shape
    Kc = centers_scaled_t.shape[1]
    tm = _tile_rows(N)
    return pl.pallas_call(
        _ln_rbf_ff_kernel,
        out_shape=jax.ShapeDtypeStruct((N, D), x.dtype),
        grid=(pl.cdiv(N, tm),),
        in_specs=[
            pl.BlockSpec((tm, D), lambda i: (i, 0)),
            pl.BlockSpec((1, D), lambda i: (0, 0)),
            pl.BlockSpec((1, D), lambda i: (0, 0)),
            pl.BlockSpec((1, D), lambda i: (0, 0)),
            pl.BlockSpec((D, Kc), lambda i: (0, 0)),
            pl.BlockSpec((1, Kc), lambda i: (0, 0)),
            pl.BlockSpec((Kc, D), lambda i: (0, 0)),
            pl.BlockSpec((1, D), lambda i: (0, 0)),
        ],
        out_specs=pl.BlockSpec((tm, D), lambda i: (i, 0)),
        compiler_params=_compiler_params(("parallel",)),
    )(x, scale.reshape(1, -1), shift.reshape(1, -1), inv_ls,
      centers_scaled_t, c2, ff_w, ff_b.reshape(1, -1))


# ------------------- kernel 4: final LN + LM head (no bias) ------------------ #

def _ln_head_kernel(x_ref, scale_ref, shift_ref, w_ref, o_ref):
    x = x_ref[...].astype(jnp.float32)
    h = _layernorm_f32(x, scale_ref[...], shift_ref[...])
    o_ref[...] = jnp.dot(h.astype(MXU_DTYPE), w_ref[...],
                         preferred_element_type=jnp.float32).astype(o_ref.dtype)


def ln_head(x, scale, shift, w, *, tile_n=512):
    # x: (N, D) f32, w: (D, V) bf16 -> logits (N, V) f32. Tiled over tokens and vocab.
    # TODO(synk): for very large D add a K-reduction grid axis with a VMEM accumulator;
    # at typical emb_dim the full (D, tile_n) weight slab fits VMEM comfortably.
    N, D = x.shape
    V = w.shape[1]
    tm = _tile_rows(N)
    tn = V if V <= tile_n else tile_n        # tile_n is a multiple of 128
    return pl.pallas_call(
        _ln_head_kernel,
        out_shape=jax.ShapeDtypeStruct((N, V), x.dtype),
        grid=(pl.cdiv(N, tm), pl.cdiv(V, tn)),
        in_specs=[
            pl.BlockSpec((tm, D), lambda i, j: (i, 0)),
            pl.BlockSpec((1, D), lambda i, j: (0, 0)),
            pl.BlockSpec((1, D), lambda i, j: (0, 0)),
            pl.BlockSpec((D, tn), lambda i, j: (0, j)),
        ],
        out_specs=pl.BlockSpec((tm, tn), lambda i, j: (i, j)),
        compiler_params=_compiler_params(("parallel", "parallel")),
    )(x, scale.reshape(1, -1), shift.reshape(1, -1), w)


# ----------------------------- model (thin glue) ----------------------------- #

def transformer_block(x, p, cfg):
    B, L, D = x.shape
    H = cfg["n_heads"]

    # attention sub-block: (LN1 + QKV) and (MHA + out_proj + residual) kernels
    qkv = ln_qkv(x.reshape(B * L, D), p["n1_scale"], p["n1_shift"], p["wqkv"])
    x = attention_block(qkv, x, p["wo"], p["bo"], H)          # dropout = identity

    # RBF FFN sub-block: one fused kernel (LN2 + RBF + FF + residual)
    y = ln_rbf_ff(x.reshape(B * L, D), p["n2_scale"], p["n2_shift"], p["inv_ls"],
                  p["centers_scaled_t"], p["c2"], p["ff_w"], p["ff_b"])
    return y.reshape(B, L, D)                                  # dropout = identity


def gpt_forward(params, in_idx, cfg):
    B, L = in_idx.shape
    D = cfg["emb_dim"]
    tok = jnp.take(params["tok_emb"], in_idx, axis=0)          # (B, L, D) gather (plain JAX)
    pos = params["pos_emb"][:L]
    x = tok + pos[None, :, :]                                  # drop_emb = identity
    for blk in params["blocks"]:
        x = transformer_block(x, blk, cfg)
    logits = ln_head(x.reshape(B * L, D), params["fn_scale"], params["fn_shift"],
                     params["out_head_w"])
    return logits.reshape(B, L, cfg["vocab_size"])


# ------------------------------ initialization ------------------------------- #

def init_params(key, cfg):
    D = cfg["emb_dim"]
    V = cfg["vocab_size"]
    C = cfg["context_length"]
    nk = 1 * D  # num_kernels

    def nxt():
        nonlocal key
        key, sub = jax.random.split(key)
        return sub

    def rand(shape, scale=0.02):
        return jax.random.normal(nxt(), shape, jnp.float32) * scale

    inv_ls = jnp.full((1, D), 1.0 / math.log(2.0), jnp.float32)  # 1 / softplus(0)

    blocks = []
    for _ in range(cfg["n_layers"]):
        wq, wk, wv = rand((D, D)), rand((D, D)), rand((D, D))
        centers = rand((nk, D), scale=0.1)
        centers_scaled = centers * inv_ls                        # precompute ARD scaling
        blocks.append(dict(
            n1_scale=jnp.ones((D,), jnp.float32), n1_shift=jnp.zeros((D,), jnp.float32),
            n2_scale=jnp.ones((D,), jnp.float32), n2_shift=jnp.zeros((D,), jnp.float32),
            wqkv=jnp.concatenate([wq, wk, wv], axis=1).astype(MXU_DTYPE),   # (D, 3D)
            wo=rand((D, D)).astype(MXU_DTYPE),
            bo=jnp.zeros((D,), jnp.float32),
            inv_ls=inv_ls,
            centers_scaled_t=centers_scaled.T,                                # (D, nk) f32
            c2=jnp.sum(centers_scaled * centers_scaled, axis=-1, keepdims=True).T,  # (1, nk)
            ff_w=rand((nk, D)).astype(MXU_DTYPE),
            ff_b=jnp.zeros((D,), jnp.float32),
        ))

    return dict(
        tok_emb=rand((V, D)),
        pos_emb=rand((C, D)),
        blocks=blocks,
        fn_scale=jnp.ones((D,), jnp.float32),
        fn_shift=jnp.zeros((D,), jnp.float32),
        out_head_w=rand((D, V)).astype(MXU_DTYPE),
    )


# ----------------------------------- main ------------------------------------ #

if __name__ == "__main__":
    cfg = dict(
        vocab_size=128,
        context_length=16,
        emb_dim=32,
        n_heads=4,
        n_layers=2,
        drop_rate=0.0,   # dropout is identity
        qkv_bias=False,
    )

    key = jax.random.PRNGKey(0)
    params = init_params(key, cfg)

    B, L = 2, 8
    in_idx = jax.random.randint(jax.random.PRNGKey(0), (B, L), 0, cfg["vocab_size"])

    fwd = jax.jit(lambda p, idx: gpt_forward(p, idx, cfg))
    logits = fwd(params, in_idx)
    jax.block_until_ready(logits)

    assert logits.shape == (B, L, cfg["vocab_size"])
    assert bool(jnp.all(jnp.isfinite(logits)))
    print("KERNEL_OK")
</pallas_src>

<mosaic_0001>
module attributes {stable_mosaic.version = 11 : i64} {
  func.func @_ln_qkv_kernel(%arg0: i32, %arg1: memref<16x32xf32, #tpu.memory_space<vmem>>, %arg2: memref<1x32xf32, #tpu.memory_space<vmem>>, %arg3: memref<1x32xf32, #tpu.memory_space<vmem>>, %arg4: memref<32x96xbf16, #tpu.memory_space<vmem>>, %arg5: memref<16x96xf32, #tpu.memory_space<vmem>>) attributes {dimension_semantics = [#tpu.dimension_semantics<parallel>], iteration_bounds = array<i64: 1>, scalar_prefetch = 0 : i64, scratch_operands = 0 : i64, tpu.core_type = #tpu.core_type<tc>, window_params = [{transform_indices = @transform_0, window_bounds = array<i64: 16, 32>}, {pipeline_mode = #tpu.pipeline_mode<synchronous>, transform_indices = @transform_1, window_bounds = array<i64: 1, 32>}, {pipeline_mode = #tpu.pipeline_mode<synchronous>, transform_indices = @transform_2, window_bounds = array<i64: 1, 32>}, {pipeline_mode = #tpu.pipeline_mode<synchronous>, transform_indices = @transform_3, window_bounds = array<i64: 32, 96>}, {transform_indices = @transform_4, window_bounds = array<i64: 16, 96>}]} {
    %c0 = arith.constant 0 : index
    %c0_0 = arith.constant 0 : index
    %0 = vector.load %arg1[%c0, %c0_0] : memref<16x32xf32, #tpu.memory_space<vmem>>, vector<16x32xf32>
    %c0_1 = arith.constant 0 : index
    %c0_2 = arith.constant 0 : index
    %1 = vector.load %arg2[%c0_1, %c0_2] : memref<1x32xf32, #tpu.memory_space<vmem>>, vector<1x32xf32>
    %c0_3 = arith.constant 0 : index
    %c0_4 = arith.constant 0 : index
    %2 = vector.load %arg3[%c0_3, %c0_4] : memref<1x32xf32, #tpu.memory_space<vmem>>, vector<1x32xf32>
    %cst = arith.constant dense<0.000000e+00> : vector<16xf32>
    %3 = vector.multi_reduction <add>, %0, %cst [1] : vector<16x32xf32> to vector<16xf32>
    %4 = vector.shape_cast %3 : vector<16xf32> to vector<16x1xf32>
    %cst_5 = arith.constant 3.200000e+01 : f32
    %5 = vector.broadcast %cst_5 : f32 to vector<16x1xf32>
    %6 = arith.divf %4, %5 : vector<16x1xf32>
    %7 = vector.broadcast %6 : vector<16x1xf32> to vector<16x32xf32>
    %8 = arith.subf %0, %7 : vector<16x32xf32>
    %9 = arith.mulf %8, %8 : vector<16x32xf32>
    %cst_6 = arith.constant dense<0.000000e+00> : vector<16xf32>
    %10 = vector.multi_reduction <add>, %9, %cst_6 [1] : vector<16x32xf32> to vector<16xf32>
    %11 = vector.shape_cast %10 : vector<16xf32> to vector<16x1xf32>
    %cst_7 = arith.constant 3.200000e+01 : f32
    %12 = vector.broadcast %cst_7 : f32 to vector<16x1xf32>
    %13 = arith.divf %11, %12 : vector<16x1xf32>
    %14 = vector.broadcast %6 : vector<16x1xf32> to vector<16x32xf32>
    %15 = arith.subf %0, %14 : vector<16x32xf32>
    %cst_8 = arith.constant 9.99999974E-6 : f32
    %16 = vector.broadcast %cst_8 : f32 to vector<16x1xf32>
    %17 = arith.addf %13, %16 : vector<16x1xf32>
    %18 = math.rsqrt %17 : vector<16x1xf32>
    %19 = vector.broadcast %18 : vector<16x1xf32> to vector<16x32xf32>
    %20 = arith.mulf %15, %19 : vector<16x32xf32>
    %21 = vector.broadcast %1 : vector<1x32xf32> to vector<16x32xf32>
    %22 = arith.mulf %21, %20 : vector<16x32xf32>
    %23 = vector.broadcast %2 : vector<1x32xf32> to vector<16x32xf32>
    %24 = arith.addf %22, %23 : vector<16x32xf32>
    %25 = arith.truncf %24 : vector<16x32xf32> to vector<16x32xbf16>
    %c0_9 = arith.constant 0 : index
    %c0_10 = arith.constant 0 : index
    %26 = vector.load %arg4[%c0_9, %c0_10] : memref<32x96xbf16, #tpu.memory_space<vmem>>, vector<32x96xbf16>
    %cst_11 = arith.constant dense<0.000000e+00> : vector<16x96xf32>
    %27 = tpu.matmul %25, %26, %cst_11 {dimension_numbers = #tpu.dot_dimension_numbers<[1], [0], [0], [1], [0, 0, 1, 1], [], []>} : vector<16x32xbf16>, vector<32x96xbf16>, vector<16x96xf32> -> vector<16x96xf32>
    %c0_12 = arith.constant 0 : index
    %c0_13 = arith.constant 0 : index
    %28 = vector.load %arg5[%c0_12, %c0_13] : memref<16x96xf32, #tpu.memory_space<vmem>>, vector<16x96xf32>
    tpu.vector_store %arg5[%c0_12, %c0_13], %27 {strides = array<i32>} : memref<16x96xf32, #tpu.memory_space<vmem>>, vector<16x96xf32>,
    return
  }
  func.func @transform_0(%arg0: i32) -> (i32, i32) {
    %c0_i32 = arith.constant 0 : i32
    %c0_i32_0 = arith.constant 0 : i32
    return %arg0, %c0_i32 : i32, i32
  }
  func.func @transform_1(%arg0: i32) -> (i32, i32) {
    %c0_i32 = arith.constant 0 : i32
    %c0_i32_0 = arith.constant 0 : i32
    %c0_i32_1 = arith.constant 0 : i32
    return %c0_i32, %c0_i32_0 : i32, i32
  }
  func.func @transform_2(%arg0: i32) -> (i32, i32) {
    %c0_i32 = arith.constant 0 : i32
    %c0_i32_0 = arith.constant 0 : i32
    %c0_i32_1 = arith.constant 0 : i32
    return %c0_i32, %c0_i32_0 : i32, i32
  }
  func.func @transform_3(%arg0: i32) -> (i32, i32) {
    %c0_i32 = arith.constant 0 : i32
    %c0_i32_0 = arith.constant 0 : i32
    %c0_i32_1 = arith.constant 0 : i32
    return %c0_i32, %c0_i32_0 : i32, i32
  }
  func.func @transform_4(%arg0: i32) -> (i32, i32) {
    %c0_i32 = arith.constant 0 : i32
    %c0_i32_0 = arith.constant 0 : i32
    return %arg0, %c0_i32 : i32, i32
  }
}

module attributes {stable_mosaic.version = 11 : i64} {
  func.func @_ln_head_kernel(%arg0: i32, %arg1: i32, %arg2: memref<16x32xf32, #tpu.memory_space<vmem>>, %arg3: memref<1x32xf32, #tpu.memory_space<vmem>>, %arg4: memref<1x32xf32, #tpu.memory_space<vmem>>, %arg5: memref<32x128xbf16, #tpu.memory_space<vmem>>, %arg6: memref<16x128xf32, #tpu.memory_space<vmem>>) attributes {dimension_semantics = [#tpu.dimension_semantics<parallel>, #tpu.dimension_semantics<parallel>], iteration_bounds = array<i64: 1, 1>, scalar_prefetch = 0 : i64, scratch_operands = 0 : i64, tpu.core_type = #tpu.core_type<tc>, window_params = [{transform_indices = @transform_0, window_bounds = array<i64: 16, 32>}, {pipeline_mode = #tpu.pipeline_mode<synchronous>, transform_indices = @transform_1, window_bounds = array<i64: 1, 32>}, {pipeline_mode = #tpu.pipeline_mode<synchronous>, transform_indices = @transform_2, window_bounds = array<i64: 1, 32>}, {transform_indices = @transform_3, window_bounds = array<i64: 32, 128>}, {transform_indices = @transform_4, window_bounds = array<i64: 16, 128>}]} {
    %c0 = arith.constant 0 : index
    %c0_0 = arith.constant 0 : index
    %0 = vector.load %arg2[%c0, %c0_0] : memref<16x32xf32, #tpu.memory_space<vmem>>, vector<16x32xf32>
    %c0_1 = arith.constant 0 : index
    %c0_2 = arith.constant 0 : index
    %1 = vector.load %arg3[%c0_1, %c0_2] : memref<1x32xf32, #tpu.memory_space<vmem>>, vector<1x32xf32>
    %c0_3 = arith.constant 0 : index
    %c0_4 = arith.constant 0 : index
    %2 = vector.load %arg4[%c0_3, %c0_4] : memref<1x32xf32, #tpu.memory_space<vmem>>, vector<1x32xf32>
    %cst = arith.constant dense<0.000000e+00> : vector<16xf32>
    %3 = vector.multi_reduction <add>, %0, %cst [1] : vector<16x32xf32> to vector<16xf32>
    %4 = vector.shape_cast %3 : vector<16xf32> to vector<16x1xf32>
    %cst_5 = arith.constant 3.200000e+01 : f32
    %5 = vector.broadcast %cst_5 : f32 to vector<16x1xf32>
    %6 = arith.divf %4, %5 : vector<16x1xf32>
    %7 = vector.broadcast %6 : vector<16x1xf32> to vector<16x32xf32>
    %8 = arith.subf %0, %7 : vector<16x32xf32>
    %9 = arith.mulf %8, %8 : vector<16x32xf32>
    %cst_6 = arith.constant dense<0.000000e+00> : vector<16xf32>
    %10 = vector.multi_reduction <add>, %9, %cst_6 [1] : vector<16x32xf32> to vector<16xf32>
    %11 = vector.shape_cast %10 : vector<16xf32> to vector<16x1xf32>
    %cst_7 = arith.constant 3.200000e+01 : f32
    %12 = vector.broadcast %cst_7 : f32 to vector<16x1xf32>
    %13 = arith.divf %11, %12 : vector<16x1xf32>
    %14 = vector.broadcast %6 : vector<16x1xf32> to vector<16x32xf32>
    %15 = arith.subf %0, %14 : vector<16x32xf32>
    %cst_8 = arith.constant 9.99999974E-6 : f32
    %16 = vector.broadcast %cst_8 : f32 to vector<16x1xf32>
    %17 = arith.addf %13, %16 : vector<16x1xf32>
    %18 = math.rsqrt %17 : vector<16x1xf32>
    %19 = vector.broadcast %18 : vector<16x1xf32> to vector<16x32xf32>
    %20 = arith.mulf %15, %19 : vector<16x32xf32>
    %21 = vector.broadcast %1 : vector<1x32xf32> to vector<16x32xf32>
    %22 = arith.mulf %21, %20 : vector<16x32xf32>
    %23 = vector.broadcast %2 : vector<1x32xf32> to vector<16x32xf32>
    %24 = arith.addf %22, %23 : vector<16x32xf32>
    %25 = arith.truncf %24 : vector<16x32xf32> to vector<16x32xbf16>
    %c0_9 = arith.constant 0 : index
    %c0_10 = arith.constant 0 : index
    %26 = vector.load %arg5[%c0_9, %c0_10] : memref<32x128xbf16, #tpu.memory_space<vmem>>, vector<32x128xbf16>
    %cst_11 = arith.constant dense<0.000000e+00> : vector<16x128xf32>
    %27 = tpu.matmul %25, %26, %cst_11 {dimension_numbers = #tpu.dot_dimension_numbers<[1], [0], [0], [1], [0, 0, 1, 1], [], []>} : vector<16x32xbf16>, vector<32x128xbf16>, vector<16x128xf32> -> vector<16x128xf32>
    %c0_12 = arith.constant 0 : index
    %c0_13 = arith.constant 0 : index
    %28 = vector.load %arg6[%c0_12, %c0_13] : memref<16x128xf32, #tpu.memory_space<vmem>>, vector<16x128xf32>
    tpu.vector_store %arg6[%c0_12, %c0_13], %27 {strides = array<i32>} : memref<16x128xf32, #tpu.memory_space<vmem>>, vector<16x128xf32>,
    return
  }
  func.func @transform_0(%arg0: i32, %arg1: i32) -> (i32, i32) {
    %c0_i32 = arith.constant 0 : i32
    %c0_i32_0 = arith.constant 0 : i32
    return %arg0, %c0_i32 : i32, i32
  }
  func.func @transform_1(%arg0: i32, %arg1: i32) -> (i32, i32) {
    %c0_i32 = arith.constant 0 : i32
    %c0_i32_0 = arith.constant 0 : i32
    %c0_i32_1 = arith.constant 0 : i32
    return %c0_i32, %c0_i32_0 : i32, i32
  }
  func.func @transform_2(%arg0: i32, %arg1: i32) -> (i32, i32) {
    %c0_i32 = arith.constant 0 : i32
    %c0_i32_0 = arith.constant 0 : i32
    %c0_i32_1 = arith.constant 0 : i32
    return %c0_i32, %c0_i32_0 : i32, i32
  }
  func.func @transform_3(%arg0: i32, %arg1: i32) -> (i32, i32) {
    %c0_i32 = arith.constant 0 : i32
    %c0_i32_0 = arith.constant 0 : i32
    return %c0_i32, %arg1 : i32, i32
  }
  func.func @transform_4(%arg0: i32, %arg1: i32) -> (i32, i32) {
    %c0_i32 = arith.constant 0 : i32
    return %arg0, %arg1 : i32, i32
  }
}

module attributes {stable_mosaic.version = 11 : i64} {
  func.func @_ln_rbf_ff_kernel(%arg0: i32, %arg1: memref<16x32xf32, #tpu.memory_space<vmem>>, %arg2: memref<1x32xf32, #tpu.memory_space<vmem>>, %arg3: memref<1x32xf32, #tpu.memory_space<vmem>>, %arg4: memref<1x32xf32, #tpu.memory_space<vmem>>, %arg5: memref<32x32xf32, #tpu.memory_space<vmem>>, %arg6: memref<1x32xf32, #tpu.memory_space<vmem>>, %arg7: memref<32x32xbf16, #tpu.memory_space<vmem>>, %arg8: memref<1x32xf32, #tpu.memory_space<vmem>>, %arg9: memref<16x32xf32, #tpu.memory_space<vmem>>) attributes {dimension_semantics = [#tpu.dimension_semantics<parallel>], iteration_bounds = array<i64: 1>, scalar_prefetch = 0 : i64, scratch_operands = 0 : i64, tpu.core_type = #tpu.core_type<tc>, window_params = [{transform_indices = @transform_0, window_bounds = array<i64: 16, 32>}, {pipeline_mode = #tpu.pipeline_mode<synchronous>, transform_indices = @transform_1, window_bounds = array<i64: 1, 32>}, {pipeline_mode = #tpu.pipeline_mode<synchronous>, transform_indices = @transform_2, window_bounds = array<i64: 1, 32>}, {pipeline_mode = #tpu.pipeline_mode<synchronous>, transform_indices = @transform_3, window_bounds = array<i64: 1, 32>}, {pipeline_mode = #tpu.pipeline_mode<synchronous>, transform_indices = @transform_4, window_bounds = array<i64: 32, 32>}, {pipeline_mode = #tpu.pipeline_mode<synchronous>, transform_indices = @transform_5, window_bounds = array<i64: 1, 32>}, {pipeline_mode = #tpu.pipeline_mode<synchronous>, transform_indices = @transform_6, window_bounds = array<i64: 32, 32>}, {pipeline_mode = #tpu.pipeline_mode<synchronous>, transform_indices = @transform_7, window_bounds = array<i64: 1, 32>}, {transform_indices = @transform_8, window_bounds = array<i64: 16, 32>}]} {
    %c0 = arith.constant 0 : index
    %c0_0 = arith.constant 0 : index
    %0 = vector.load %arg1[%c0, %c0_0] : memref<16x32xf32, #tpu.memory_space<vmem>>, vector<16x32xf32>
    %c0_1 = arith.constant 0 : index
    %c0_2 = arith.constant 0 : index
    %1 = vector.load %arg2[%c0_1, %c0_2] : memref<1x32xf32, #tpu.memory_space<vmem>>, vector<1x32xf32>
    %c0_3 = arith.constant 0 : index
    %c0_4 = arith.constant 0 : index
    %2 = vector.load %arg3[%c0_3, %c0_4] : memref<1x32xf32, #tpu.memory_space<vmem>>, vector<1x32xf32>
    %cst = arith.constant dense<0.000000e+00> : vector<16xf32>
    %3 = vector.multi_reduction <add>, %0, %cst [1] : vector<16x32xf32> to vector<16xf32>
    %4 = vector.shape_cast %3 : vector<16xf32> to vector<16x1xf32>
    %cst_5 = arith.constant 3.200000e+01 : f32
    %5 = vector.broadcast %cst_5 : f32 to vector<16x1xf32>
    %6 = arith.divf %4, %5 : vector<16x1xf32>
    %7 = vector.broadcast %6 : vector<16x1xf32> to vector<16x32xf32>
    %8 = arith.subf %0, %7 : vector<16x32xf32>
    %9 = arith.mulf %8, %8 : vector<16x32xf32>
    %cst_6 = arith.constant dense<0.000000e+00> : vector<16xf32>
    %10 = vector.multi_reduction <add>, %9, %cst_6 [1] : vector<16x32xf32> to vector<16xf32>
    %11 = vector.shape_cast %10 : vector<16xf32> to vector<16x1xf32>
    %cst_7 = arith.constant 3.200000e+01 : f32
    %12 = vector.broadcast %cst_7 : f32 to vector<16x1xf32>
    %13 = arith.divf %11, %12 : vector<16x1xf32>
    %14 = vector.broadcast %6 : vector<16x1xf32> to vector<16x32xf32>
    %15 = arith.subf %0, %14 : vector<16x32xf32>
    %cst_8 = arith.constant 9.99999974E-6 : f32
    %16 = vector.broadcast %cst_8 : f32 to vector<16x1xf32>
    %17 = arith.addf %13, %16 : vector<16x1xf32>
    %18 = math.rsqrt %17 : vector<16x1xf32>
    %19 = vector.broadcast %18 : vector<16x1xf32> to vector<16x32xf32>
    %20 = arith.mulf %15, %19 : vector<16x32xf32>
    %21 = vector.broadcast %1 : vector<1x32xf32> to vector<16x32xf32>
    %22 = arith.mulf %21, %20 : vector<16x32xf32>
    %23 = vector.broadcast %2 : vector<1x32xf32> to vector<16x32xf32>
    %24 = arith.addf %22, %23 : vector<16x32xf32>
    %c0_9 = arith.constant 0 : index
    %c0_10 = arith.constant 0 : index
    %25 = vector.load %arg4[%c0_9, %c0_10] : memref<1x32xf32, #tpu.memory_space<vmem>>, vector<1x32xf32>
    %26 = vector.broadcast %25 : vector<1x32xf32> to vector<16x32xf32>
    %27 = arith.mulf %24, %26 : vector<16x32xf32>
    %28 = arith.mulf %27, %27 : vector<16x32xf32>
    %cst_11 = arith.constant dense<0.000000e+00> : vector<16xf32>
    %29 = vector.multi_reduction <add>, %28, %cst_11 [1] : vector<16x32xf32> to vector<16xf32>
    %30 = vector.shape_cast %29 : vector<16xf32> to vector<16x1xf32>
    %c0_12 = arith.constant 0 : index
    %c0_13 = arith.constant 0 : index
    %31 = vector.load %arg5[%c0_12, %c0_13] : memref<32x32xf32, #tpu.memory_space<vmem>>, vector<32x32xf32>
    %cst_14 = arith.constant dense<0.000000e+00> : vector<16x32xf32>
    %32 = tpu.matmul %27, %31, %cst_14 {dimension_numbers = #tpu.dot_dimension_numbers<[1], [0], [0], [1], [0, 0, 1, 1], [], []>} : vector<16x32xf32>, vector<32x32xf32>, vector<16x32xf32> -> vector<16x32xf32>
    %c0_15 = arith.constant 0 : index
    %c0_16 = arith.constant 0 : index
    %33 = vector.load %arg6[%c0_15, %c0_16] : memref<1x32xf32, #tpu.memory_space<vmem>>, vector<1x32xf32>
    %34 = vector.broadcast %30 : vector<16x1xf32> to vector<16x32xf32>
    %35 = vector.broadcast %33 : vector<1x32xf32> to vector<16x32xf32>
    %36 = arith.addf %34, %35 : vector<16x32xf32>
    %cst_17 = arith.constant 2.000000e+00 : f32
    %37 = vector.broadcast %cst_17 : f32 to vector<16x32xf32>
    %38 = arith.mulf %37, %32 : vector<16x32xf32>
    %39 = arith.subf %36, %38 : vector<16x32xf32>
    %cst_18 = arith.constant 0.000000e+00 : f32
    %40 = vector.broadcast %cst_18 : f32 to vector<16x32xf32>
    %41 = arith.maximumf %39, %40 : vector<16x32xf32>
    %cst_19 = arith.constant -5.000000e-01 : f32
    %42 = vector.broadcast %cst_19 : f32 to vector<16x32xf32>
    %43 = arith.mulf %42, %41 : vector<16x32xf32>
    %44 = math.exp %43 : vector<16x32xf32>
    %45 = arith.truncf %44 : vector<16x32xf32> to vector<16x32xbf16>
    %c0_20 = arith.constant 0 : index
    %c0_21 = arith.constant 0 : index
    %46 = vector.load %arg7[%c0_20, %c0_21] : memref<32x32xbf16, #tpu.memory_space<vmem>>, vector<32x32xbf16>
    %cst_22 = arith.constant dense<0.000000e+00> : vector<16x32xf32>
    %47 = tpu.matmul %45, %46, %cst_22 {dimension_numbers = #tpu.dot_dimension_numbers<[1], [0], [0], [1], [0, 0, 1, 1], [], []>} : vector<16x32xbf16>, vector<32x32xbf16>, vector<16x32xf32> -> vector<16x32xf32>
    %48 = arith.addf %0, %47 : vector<16x32xf32>
    %c0_23 = arith.constant 0 : index
    %c0_24 = arith.constant 0 : index
    %49 = vector.load %arg8[%c0_23, %c0_24] : memref<1x32xf32, #tpu.memory_space<vmem>>, vector<1x32xf32>
    %50 = vector.broadcast %49 : vector<1x32xf32> to vector<16x32xf32>
    %51 = arith.addf %48, %50 : vector<16x32xf32>
    %c0_25 = arith.constant 0 : index
    %c0_26 = arith.constant 0 : index
    %52 = vector.load %arg9[%c0_25, %c0_26] : memref<16x32xf32, #tpu.memory_space<vmem>>, vector<16x32xf32>
    tpu.vector_store %arg9[%c0_25, %c0_26], %51 {strides = array<i32>} : memref<16x32xf32, #tpu.memory_space<vmem>>, vector<16x32xf32>,
    return
  }
  func.func @transform_0(%arg0: i32) -> (i32, i32) {
    %c0_i32 = arith.constant 0 : i32
    %c0_i32_0 = arith.constant 0 : i32
    return %arg0, %c0_i32 : i32, i32
  }
  func.func @transform_1(%arg0: i32) -> (i32, i32) {
    %c0_i32 = arith.constant 0 : i32
    %c0_i32_0 = arith.constant 0 : i32
    %c0_i32_1 = arith.constant 0 : i32
    return %c0_i32, %c0_i32_0 : i32, i32
  }
  func.func @transform_2(%arg0: i32) -> (i32, i32) {
    %c0_i32 = arith.constant 0 : i32
    %c0_i32_0 = arith.constant 0 : i32
    %c0_i32_1 = arith.constant 0 : i32
    return %c0_i32, %c0_i32_0 : i32, i32
  }
  func.func @transform_3(%arg0: i32) -> (i32, i32) {
    %c0_i32 = arith.constant 0 : i32
    %c0_i32_0 = arith.constant 0 : i32
    %c0_i32_1 = arith.constant 0 : i32
    return %c0_i32, %c0_i32_0 : i32, i32
  }
  func.func @transform_4(%arg0: i32) -> (i32, i32) {
    %c0_i32 = arith.constant 0 : i32
    %c0_i32_0 = arith.constant 0 : i32
    %c0_i32_1 = arith.constant 0 : i32
    return %c0_i32, %c0_i32_0 : i32, i32
  }
  func.func @transform_5(%arg0: i32) -> (i32, i32) {
    %c0_i32 = arith.constant 0 : i32
    %c0_i32_0 = arith.constant 0 : i32
    %c0_i32_1 = arith.constant 0 : i32
    return %c0_i32, %c0_i32_0 : i32, i32
  }
  func.func @transform_6(%arg0: i32) -> (i32, i32) {
    %c0_i32 = arith.constant 0 : i32
    %c0_i32_0 = arith.constant 0 : i32
    %c0_i32_1 = arith.constant 0 : i32
    return %c0_i32, %c0_i32_0 : i32, i32
  }
  func.func @transform_7(%arg0: i32) -> (i32, i32) {
    %c0_i32 = arith.constant 0 : i32
    %c0_i32_0 = arith.constant 0 : i32
    %c0_i32_1 = arith.constant 0 : i32
    return %c0_i32, %c0_i32_0 : i32, i32
  }
  func.func @transform_8(%arg0: i32) -> (i32, i32) {
    %c0_i32 = arith.constant 0 : i32
    %c0_i32_0 = arith.constant 0 : i32
    return %arg0, %c0_i32 : i32, i32
  }
}

module attributes {stable_mosaic.version = 11 : i64} {
  func.func @_attn_block_kernel(%arg0: i32, %arg1: memref<1x8x96xf32, #tpu.memory_space<vmem>>, %arg2: memref<32x32xbf16, #tpu.memory_space<vmem>>, %arg3: memref<1x32xf32, #tpu.memory_space<vmem>>, %arg4: memref<1x8x32xf32, #tpu.memory_space<vmem>>, %arg5: memref<1x8x32xf32, #tpu.memory_space<vmem>>) attributes {dimension_semantics = [#tpu.dimension_semantics<parallel>], iteration_bounds = array<i64: 2>, scalar_prefetch = 0 : i64, scratch_operands = 0 : i64, tpu.core_type = #tpu.core_type<tc>, window_params = [{transform_indices = @transform_0, window_bounds = array<i64: 1, 8, 96>}, {pipeline_mode = #tpu.pipeline_mode<synchronous>, transform_indices = @transform_1, window_bounds = array<i64: 32, 32>}, {pipeline_mode = #tpu.pipeline_mode<synchronous>, transform_indices = @transform_2, window_bounds = array<i64: 1, 32>}, {transform_indices = @transform_3, window_bounds = array<i64: 1, 8, 32>}, {transform_indices = @transform_4, window_bounds = array<i64: 1, 8, 32>}]} {
    %c0 = arith.constant 0 : index
    %c0_0 = arith.constant 0 : index
    %c0_1 = arith.constant 0 : index
    %0 = vector.load %arg1[%c0, %c0_0, %c0_1] : memref<1x8x96xf32, #tpu.memory_space<vmem>>, vector<1x8x96xf32>
    %1 = vector.shape_cast %0 : vector<1x8x96xf32> to vector<8x96xf32>
    %c0_2 = arith.constant 0 : index
    %c0_3 = arith.constant 0 : index
    %2 = vector.load %arg2[%c0_2, %c0_3] : memref<32x32xbf16, #tpu.memory_space<vmem>>, vector<32x32xbf16>
    %3 = tpu.iota {dimensions = array<i32: 0>} : vector<8x8xi32>
    %4 = tpu.iota {dimensions = array<i32: 1>} : vector<8x8xi32>
    %5 = arith.cmpi sgt, %4, %3 : vector<8x8xi32>
    %c0_4 = arith.constant 0 : index
    %c0_5 = arith.constant 0 : index
    %c0_6 = arith.constant 0 : index
    %6 = vector.load %arg4[%c0_4, %c0_5, %c0_6] : memref<1x8x32xf32, #tpu.memory_space<vmem>>, vector<1x8x32xf32>
    %7 = vector.shape_cast %6 : vector<1x8x32xf32> to vector<8x32xf32>
    %c0_7 = arith.constant 0 : index
    %c0_8 = arith.constant 0 : index
    %8 = vector.load %arg3[%c0_7, %c0_8] : memref<1x32xf32, #tpu.memory_space<vmem>>, vector<1x32xf32>
    %9 = vector.broadcast %8 : vector<1x32xf32> to vector<8x32xf32>
    %10 = arith.addf %7, %9 : vector<8x32xf32>
    %11 = vector.extract_strided_slice %1 {offsets = [0, 0], sizes = [8, 8], strides = [1, 1]} : vector<8x96xf32> to vector<8x8xf32>
    %cst = arith.constant 0.353553385 : f32
    %12 = vector.broadcast %cst : f32 to vector<8x8xf32>
    %13 = arith.mulf %11, %12 : vector<8x8xf32>
    %14 = vector.extract_strided_slice %1 {offsets = [0, 32], sizes = [8, 8], strides = [1, 1]} : vector<8x96xf32> to vector<8x8xf32>
    %15 = vector.extract_strided_slice %1 {offsets = [0, 64], sizes = [8, 8], strides = [1, 1]} : vector<8x96xf32> to vector<8x8xf32>
    %16 = arith.truncf %13 : vector<8x8xf32> to vector<8x8xbf16>
    %17 = arith.truncf %14 : vector<8x8xf32> to vector<8x8xbf16>
    %cst_9 = arith.constant dense<0.000000e+00> : vector<8x8xf32>
    %18 = tpu.matmul %16, %17, %cst_9 {dimension_numbers = #tpu.dot_dimension_numbers<[1], [1], [0], [0], [0, 0, 1, 0], [], []>} : vector<8x8xbf16>, vector<8x8xbf16>, vector<8x8xf32> -> vector<8x8xf32>
    %cst_10 = arith.constant 0xFF800000 : f32
    %19 = vector.broadcast %cst_10 : f32 to vector<8x8xf32>
    %20 = arith.select %5, %19, %18 : vector<8x8xi1>, vector<8x8xf32>
    %cst_11 = arith.constant dense<0xFF800000> : vector<8xf32>
    %21 = vector.multi_reduction <maximumf>, %20, %cst_11 [1] : vector<8x8xf32> to vector<8xf32>
    %22 = vector.shape_cast %21 : vector<8xf32> to vector<8x1xf32>
    %23 = vector.broadcast %22 : vector<8x1xf32> to vector<8x8xf32>
    %24 = arith.subf %20, %23 : vector<8x8xf32>
    %25 = math.exp %24 : vector<8x8xf32>
    %cst_12 = arith.constant dense<0.000000e+00> : vector<8xf32>
    %26 = vector.multi_reduction <add>, %25, %cst_12 [1] : vector<8x8xf32> to vector<8xf32>
    %27 = vector.shape_cast %26 : vector<8xf32> to vector<8x1xf32>
    %28 = tpu.reciprocal %27 {approx = true} : vector<8x1xf32> -> vector<8x1xf32>
    %29 = vector.broadcast %28 : vector<8x1xf32> to vector<8x8xf32>
    %30 = arith.mulf %25, %29 : vector<8x8xf32>
    %31 = arith.truncf %30 : vector<8x8xf32> to vector<8x8xbf16>
    %32 = arith.truncf %15 : vector<8x8xf32> to vector<8x8xbf16>
    %cst_13 = arith.constant dense<0.000000e+00> : vector<8x8xf32>
    %33 = tpu.matmul %31, %32, %cst_13 {dimension_numbers = #tpu.dot_dimension_numbers<[1], [0], [0], [1], [0, 0, 1, 1], [], []>} : vector<8x8xbf16>, vector<8x8xbf16>, vector<8x8xf32> -> vector<8x8xf32>
    %34 = arith.truncf %33 : vector<8x8xf32> to vector<8x8xbf16>
    %35 = vector.extract_strided_slice %2 {offsets = [0, 0], sizes = [8, 32], strides = [1, 1]} : vector<32x32xbf16> to vector<8x32xbf16>
    %cst_14 = arith.constant dense<0.000000e+00> : vector<8x32xf32>
    %36 = tpu.matmul %34, %35, %cst_14 {dimension_numbers = #tpu.dot_dimension_numbers<[1], [0], [0], [1], [0, 0, 1, 1], [], []>} : vector<8x8xbf16>, vector<8x32xbf16>, vector<8x32xf32> -> vector<8x32xf32>
    %37 = arith.addf %10, %36 : vector<8x32xf32>
    %38 = vector.extract_strided_slice %1 {offsets = [0, 8], sizes = [8, 8], strides = [1, 1]} : vector<8x96xf32> to vector<8x8xf32>
    %cst_15 = arith.constant 0.353553385 : f32
    %39 = vector.broadcast %cst_15 : f32 to vector<8x8xf32>
    %40 = arith.mulf %38, %39 : vector<8x8xf32>
    %41 = vector.extract_strided_slice %1 {offsets = [0, 40], sizes = [8, 8], strides = [1, 1]} : vector<8x96xf32> to vector<8x8xf32>
    %42 = vector.extract_strided_slice %1 {offsets = [0, 72], sizes = [8, 8], strides = [1, 1]} : vector<8x96xf32> to vector<8x8xf32>
    %43 = arith.truncf %40 : vector<8x8xf32> to vector<8x8xbf16>
    %44 = arith.truncf %41 : vector<8x8xf32> to vector<8x8xbf16>
    %cst_16 = arith.constant dense<0.000000e+00> : vector<8x8xf32>
    %45 = tpu.matmul %43, %44, %cst_16 {dimension_numbers = #tpu.dot_dimension_numbers<[1], [1], [0], [0], [0, 0, 1, 0], [], []>} : vector<8x8xbf16>, vector<8x8xbf16>, vector<8x8xf32> -> vector<8x8xf32>
    %cst_17 = arith.constant 0xFF800000 : f32
    %46 = vector.broadcast %cst_17 : f32 to vector<8x8xf32>
    %47 = arith.select %5, %46, %45 : vector<8x8xi1>, vector<8x8xf32>
    %cst_18 = arith.constant dense<0xFF800000> : vector<8xf32>
    %48 = vector.multi_reduction <maximumf>, %47, %cst_18 [1] : vector<8x8xf32> to vector<8xf32>
    %49 = vector.shape_cast %48 : vector<8xf32> to vector<8x1xf32>
    %50 = vector.broadcast %49 : vector<8x1xf32> to vector<8x8xf32>
    %51 = arith.subf %47, %50 : vector<8x8xf32>
    %52 = math.exp %51 : vector<8x8xf32>
    %cst_19 = arith.constant dense<0.000000e+00> : vector<8xf32>
    %53 = vector.multi_reduction <add>, %52, %cst_19 [1] : vector<8x8xf32> to vector<8xf32>
    %54 = vector.shape_cast %53 : vector<8xf32> to vector<8x1xf32>
    %55 = tpu.reciprocal %54 {approx = true} : vector<8x1xf32> -> vector<8x1xf32>
    %56 = vector.broadcast %55 : vector<8x1xf32> to vector<8x8xf32>
    %57 = arith.mulf %52, %56 : vector<8x8xf32>
    %58 = arith.truncf %57 : vector<8x8xf32> to vector<8x8xbf16>
    %59 = arith.truncf %42 : vector<8x8xf32> to vector<8x8xbf16>
    %cst_20 = arith.constant dense<0.000000e+00> : vector<8x8xf32>
    %60 = tpu.matmul %58, %59, %cst_20 {dimension_numbers = #tpu.dot_dimension_numbers<[1], [0], [0], [1], [0, 0, 1, 1], [], []>} : vector<8x8xbf16>, vector<8x8xbf16>, vector<8x8xf32> -> vector<8x8xf32>
    %61 = arith.truncf %60 : vector<8x8xf32> to vector<8x8xbf16>
    %62 = vector.extract_strided_slice %2 {offsets = [8, 0], sizes = [8, 32], strides = [1, 1]} : vector<32x32xbf16> to vector<8x32xbf16>
    %cst_21 = arith.constant dense<0.000000e+00> : vector<8x32xf32>
    %63 = tpu.matmul %61, %62, %cst_21 {dimension_numbers = #tpu.dot_dimension_numbers<[1], [0], [0], [1], [0, 0, 1, 1], [], []>} : vector<8x8xbf16>, vector<8x32xbf16>, vector<8x32xf32> -> vector<8x32xf32>
    %64 = arith.addf %37, %63 : vector<8x32xf32>
    %65 = vector.extract_strided_slice %1 {offsets = [0, 16], sizes = [8, 8], strides = [1, 1]} : vector<8x96xf32> to vector<8x8xf32>
    %cst_22 = arith.constant 0.353553385 : f32
    %66 = vector.broadcast %cst_22 : f32 to vector<8x8xf32>
    %67 = arith.mulf %65, %66 : vector<8x8xf32>
    %68 = vector.extract_strided_slice %1 {offsets = [0, 48], sizes = [8, 8], strides = [1, 1]} : vector<8x96xf32> to vector<8x8xf32>
    %69 = vector.extract_strided_slice %1 {offsets = [0, 80], sizes = [8, 8], strides = [1, 1]} : vector<8x96xf32> to vector<8x8xf32>
    %70 = arith.truncf %67 : vector<8x8xf32> to vector<8x8xbf16>
    %71 = arith.truncf %68 : vector<8x8xf32> to vector<8x8xbf16>
    %cst_23 = arith.constant dense<0.000000e+00> : vector<8x8xf32>
    %72 = tpu.matmul %70, %71, %cst_23 {dimension_numbers = #tpu.dot_dimension_numbers<[1], [1], [0], [0], [0, 0, 1, 0], [], []>} : vector<8x8xbf16>, vector<8x8xbf16>, vector<8x8xf32> -> vector<8x8xf32>
    %cst_24 = arith.constant 0xFF800000 : f32
    %73 = vector.broadcast %cst_24 : f32 to vector<8x8xf32>
    %74 = arith.select %5, %73, %72 : vector<8x8xi1>, vector<8x8xf32>
    %cst_25 = arith.constant dense<0xFF800000> : vector<8xf32>
    %75 = vector.multi_reduction <maximumf>, %74, %cst_25 [1] : vector<8x8xf32> to vector<8xf32>
    %76 = vector.shape_cast %75 : vector<8xf32> to vector<8x1xf32>
    %77 = vector.broadcast %76 : vector<8x1xf32> to vector<8x8xf32>
    %78 = arith.subf %74, %77 : vector<8x8xf32>
    %79 = math.exp %78 : vector<8x8xf32>
    %cst_26 = arith.constant dense<0.000000e+00> : vector<8xf32>
    %80 = vector.multi_reduction <add>, %79, %cst_26 [1] : vector<8x8xf32> to vector<8xf32>
    %81 = vector.shape_cast %80 : vector<8xf32> to vector<8x1xf32>
    %82 = tpu.reciprocal %81 {approx = true} : vector<8x1xf32> -> vector<8x1xf32>
    %83 = vector.broadcast %82 : vector<8x1xf32> to vector<8x8xf32>
    %84 = arith.mulf %79, %83 : vector<8x8xf32>
    %85 = arith.truncf %84 : vector<8x8xf32> to vector<8x8xbf16>
    %86 = arith.truncf %69 : vector<8x8xf32> to vector<8x8xbf16>
    %cst_27 = arith.constant dense<0.000000e+00> : vector<8x8xf32>
    %87 = tpu.matmul %85, %86, %cst_27 {dimension_numbers = #tpu.dot_dimension_numbers<[1], [0], [0], [1], [0, 0, 1, 1], [], []>} : vector<8x8xbf16>, vector<8x8xbf16>, vector<8x8xf32> -> vector<8x8xf32>
    %88 = arith.truncf %87 : vector<8x8xf32> to vector<8x8xbf16>
    %89 = vector.extract_strided_slice %2 {offsets = [16, 0], sizes = [8, 32], strides = [1, 1]} : vector<32x32xbf16> to vector<8x32xbf16>
    %cst_28 = arith.constant dense<0.000000e+00> : vector<8x32xf32>
    %90 = tpu.matmul %88, %89, %cst_28 {dimension_numbers = #tpu.dot_dimension_numbers<[1], [0], [0], [1], [0, 0, 1, 1], [], []>} : vector<8x8xbf16>, vector<8x32xbf16>, vector<8x32xf32> -> vector<8x32xf32>
    %91 = arith.addf %64, %90 : vector<8x32xf32>
    %92 = vector.extract_strided_slice %1 {offsets = [0, 24], sizes = [8, 8], strides = [1, 1]} : vector<8x96xf32> to vector<8x8xf32>
    %cst_29 = arith.constant 0.353553385 : f32
    %93 = vector.broadcast %cst_29 : f32 to vector<8x8xf32>
    %94 = arith.mulf %92, %93 : vector<8x8xf32>
    %95 = vector.extract_strided_slice %1 {offsets = [0, 56], sizes = [8, 8], strides = [1, 1]} : vector<8x96xf32> to vector<8x8xf32>
    %96 = vector.extract_strided_slice %1 {offsets = [0, 88], sizes = [8, 8], strides = [1, 1]} : vector<8x96xf32> to vector<8x8xf32>
    %97 = arith.truncf %94 : vector<8x8xf32> to vector<8x8xbf16>
    %98 = arith.truncf %95 : vector<8x8xf32> to vector<8x8xbf16>
    %cst_30 = arith.constant dense<0.000000e+00> : vector<8x8xf32>
    %99 = tpu.matmul %97, %98, %cst_30 {dimension_numbers = #tpu.dot_dimension_numbers<[1], [1], [0], [0], [0, 0, 1, 0], [], []>} : vector<8x8xbf16>, vector<8x8xbf16>, vector<8x8xf32> -> vector<8x8xf32>
    %cst_31 = arith.constant 0xFF800000 : f32
    %100 = vector.broadcast %cst_31 : f32 to vector<8x8xf32>
    %101 = arith.select %5, %100, %99 : vector<8x8xi1>, vector<8x8xf32>
    %cst_32 = arith.constant dense<0xFF800000> : vector<8xf32>
    %102 = vector.multi_reduction <maximumf>, %101, %cst_32 [1] : vector<8x8xf32> to vector<8xf32>
    %103 = vector.shape_cast %102 : vector<8xf32> to vector<8x1xf32>
    %104 = vector.broadcast %103 : vector<8x1xf32> to vector<8x8xf32>
    %105 = arith.subf %101, %104 : vector<8x8xf32>
    %106 = math.exp %105 : vector<8x8xf32>
    %cst_33 = arith.constant dense<0.000000e+00> : vector<8xf32>
    %107 = vector.multi_reduction <add>, %106, %cst_33 [1] : vector<8x8xf32> to vector<8xf32>
    %108 = vector.shape_cast %107 : vector<8xf32> to vector<8x1xf32>
    %109 = tpu.reciprocal %108 {approx = true} : vector<8x1xf32> -> vector<8x1xf32>
    %110 = vector.broadcast %109 : vector<8x1xf32> to vector<8x8xf32>
    %111 = arith.mulf %106, %110 : vector<8x8xf32>
    %112 = arith.truncf %111 : vector<8x8xf32> to vector<8x8xbf16>
    %113 = arith.truncf %96 : vector<8x8xf32> to vector<8x8xbf16>
    %cst_34 = arith.constant dense<0.000000e+00> : vector<8x8xf32>
    %114 = tpu.matmul %112, %113, %cst_34 {dimension_numbers = #tpu.dot_dimension_numbers<[1], [0], [0], [1], [0, 0, 1, 1], [], []>} : vector<8x8xbf16>, vector<8x8xbf16>, vector<8x8xf32> -> vector<8x8xf32>
    %115 = arith.truncf %114 : vector<8x8xf32> to vector<8x8xbf16>
    %116 = vector.extract_strided_slice %2 {offsets = [24, 0], sizes = [8, 32], strides = [1, 1]} : vector<32x32xbf16> to vector<8x32xbf16>
    %cst_35 = arith.constant dense<0.000000e+00> : vector<8x32xf32>
    %117 = tpu.matmul %115, %116, %cst_35 {dimension_numbers = #tpu.dot_dimension_numbers<[1], [0], [0], [1], [0, 0, 1, 1], [], []>} : vector<8x8xbf16>, vector<8x32xbf16>, vector<8x32xf32> -> vector<8x32xf32>
    %118 = arith.addf %91, %117 : vector<8x32xf32>
    %c0_36 = arith.constant 0 : index
    %c0_37 = arith.constant 0 : index
    %c0_38 = arith.constant 0 : index
    %119 = vector.load %arg5[%c0_36, %c0_37, %c0_38] : memref<1x8x32xf32, #tpu.memory_space<vmem>>, vector<1x8x32xf32>
    %120 = vector.shape_cast %119 : vector<1x8x32xf32> to vector<8x32xf32>
    %121 = vector.shape_cast %118 : vector<8x32xf32> to vector<1x8x32xf32>
    tpu.vector_store %arg5[%c0_36, %c0_37, %c0_38], %121 {strides = array<i32>} : memref<1x8x32xf32, #tpu.memory_space<vmem>>, vector<1x8x32xf32>,
    return
  }
  func.func @transform_0(%arg0: i32) -> (i32, i32, i32) {
    %c0_i32 = arith.constant 0 : i32
    %c0_i32_0 = arith.constant 0 : i32
    %c0_i32_1 = arith.constant 0 : i32
    return %arg0, %c0_i32, %c0_i32_0 : i32, i32, i32
  }
  func.func @transform_1(%arg0: i32) -> (i32, i32) {
    %c0_i32 = arith.constant 0 : i32
    %c0_i32_0 = arith.constant 0 : i32
    %c0_i32_1 = arith.constant 0 : i32
    return %c0_i32, %c0_i32_0 : i32, i32
  }
  func.func @transform_2(%arg0: i32) -> (i32, i32) {
    %c0_i32 = arith.constant 0 : i32
    %c0_i32_0 = arith.constant 0 : i32
    %c0_i32_1 = arith.constant 0 : i32
    return %c0_i32, %c0_i32_0 : i32, i32
  }
  func.func @transform_3(%arg0: i32) -> (i32, i32, i32) {
    %c0_i32 = arith.constant 0 : i32
    %c0_i32_0 = arith.constant 0 : i32
    %c0_i32_1 = arith.constant 0 : i32
    return %arg0, %c0_i32, %c0_i32_0 : i32, i32, i32
  }
  func.func @transform_4(%arg0: i32) -> (i32, i32, i32) {
    %c0_i32 = arith.constant 0 : i32
    %c0_i32_0 = arith.constant 0 : i32
    %c0_i32_1 = arith.constant 0 : i32
    return %arg0, %c0_i32, %c0_i32_0 : i32, i32, i32
  }
}

</mosaic_0001>

<llo_original>
// kernel: _lambda_.7
$region0: #{_lambda_.7}
  #allocation0 [shape = 'u32[]', space=smem, size = 0x4, offset = 0x4, fixed_abs, tag = 'smem constant byte address 0x4 - core index']
  #allocation1 [shape = 'u32[144,128]{1,0:T(1,128)}', space=vmem, size = 0x12000, scoped, tag = 'internal scratch']
  %s0 = inlined_call_operand.vmem [shape: f32[16,32], index: 0, kind: input, shape index: {}]
  %s1 = inlined_call_operand.vmem [shape: f32[1,32], index: 1, kind: input, shape index: {}]
  %s2 = inlined_call_operand.vmem [shape: f32[1,32], index: 2, kind: input, shape index: {}]
  %s3 = inlined_call_operand.vmem [shape: bf16[32,96], index: 3, kind: input, shape index: {}]
  %s4 = inlined_call_operand.vmem [shape: f32[16,96], index: 4, kind: output, shape index: {}]
  %s5 = sld [smem:[#allocation0]]
  $region26: #{_lambda_.7} parent=0
    _
  %s7 = ssub.s32 1, %s5
  %s8 = scalar_select 0, %s7, %s5
  // Predicated region
  $region2: #{_lambda_.7} parent=0 // pred_check
    _
  $region3: #{_lambda_.7} parent=0 // pred_check_branch
    %10 = sbr.rel (0) target = $region5
  $region4: #{_lambda_.7} parent=0 // pred_region
    _
  $region5: #{_lambda_.7} parent=0 // pred_fallthru
    _
  // Predicated region
  $region6: #{_lambda_.7} parent=0 // pred_check
    _
  $region7: #{_lambda_.7} parent=0 // pred_check_branch
    %12 = sbr.rel (0) target = $region9
  $region8: #{_lambda_.7} parent=0 // pred_region
    _
  $region9: #{_lambda_.7} parent=0 // pred_fallthru
    _
  // Predicated region
  $region10: #{_lambda_.7} parent=0 // pred_check
    _
  $region11: #{_lambda_.7} parent=0 // pred_check_branch
    %14 = sbr.rel (0) target = $region13
  $region12: #{_lambda_.7} parent=0 // pred_region
    _
  $region13: #{_lambda_.7} parent=0 // pred_fallthru
    _
  // Predicated region
  $region14: #{_lambda_.7} parent=0 // pred_check
    _
  $region15: #{_lambda_.7} parent=0 // pred_check_branch
    %16 = sbr.rel (0) target = $region17
  $region16: #{_lambda_.7} parent=0 // pred_region
    _
  $region17: #{_lambda_.7} parent=0 // pred_fallthru
    _
  %v18 = vld [vmem:[%s0] sm:$0xff]
  %v19 = vld [vmem:[%s0 + $0x8] sm:$0xff]
  %v20 = vld [vmem:[%s1] sm:$0x1]
  %v21 = vld [vmem:[%s2] sm:$0x1]
  %vm22 = vcmask 261120
  %v23 = vsel %vm22, %v18, 0.0
  %24 = vadd.xlane.f32.xlu0 %v23
  %v25 = vpop.xlane.xlu0 %24
  %v26 = vsel %vm22, %v19, 0.0
  %27 = vadd.xlane.f32.xlu0 %v26
  %v28 = vpop.xlane.xlu0 %27
  %v29 = vrcp.pop 32.0
  %v30 = vmul.f32 %v25, %v29
  %v31 = vmul.f32 %v28, %v29
  %v32 = vsub.f32 %v18, %v30
  %v33 = vsub.f32 %v19, %v31
  %v34 = vmul.f32 %v32, %v32
  %v35 = vmul.f32 %v33, %v33
  %v36 = vsel %vm22, %v34, 0.0
  %37 = vadd.xlane.f32.xlu0 %v36
  %v38 = vpop.xlane.xlu0 %37
  %v39 = vsel %vm22, %v35, 0.0
  %40 = vadd.xlane.f32.xlu0 %v39
  %v41 = vpop.xlane.xlu0 %40
  %v42 = vmul.f32 %v38, %v29
  %v43 = vmul.f32 %v41, %v29
  %v44 = vadd.f32 %v42, 1e-05
  %v45 = vadd.f32 %v43, 1e-05
  %v46 = vrsqrt.pop %v44
  %v47 = vrsqrt.pop %v45
  %v48 = vmul.f32 %v32, %v46
  %v49 = vmul.f32 %v33, %v47
  %v51 = vlaneseq
  %v52 = vshrl.u32 %v51, 7
  %v53 = vsub.s32 0, %v52
  %v54 = vrot.slane %v20, %v53
  %v56 = vmul.f32 %v54, %v48
  %v57 = vmul.f32 %v54, %v49
  %v59 = vlaneseq
  %v60 = vshrl.u32 %v59, 7
  %v61 = vsub.s32 0, %v60
  %v62 = vrot.slane %v21, %v61
  %v64 = vadd.f32 %v56, %v62
  %v65 = vadd.f32 %v57, %v62
  %v66 = vpack.c.bf16 %v65, %v64
  %v67 = vld [vmem:[%s3] sm:$0xf]
  %v68 = vld [vmem:[%s3 + $0x4] sm:$0xf]
  %v69 = vld [vmem:[%s3 + $0x8] sm:$0xf]
  %v70 = vld [vmem:[%s3 + $0xc] sm:$0xf]
  %v75 = vunpack.c.l.b16 %v67
  %v76 = vunpack.c.l.b16 %v68
  %v77 = vunpack.c.l.b16 %v69
  %v78 = vunpack.c.l.b16 %v70
  %v79 = vpack.c.b16 %v76, %v75
  %v80 = vpack.c.b16 %v78, %v77
  %v84 = vsel %vm22, %v66, 0
  %86 = vmatprep.subr.bf16.mxu0 0
  %87 = vmatpush1.bf16.msra.mxu0 0
  %88 = vmatprep.subr.bf16.mxu0 0
  %89 = vmatpush1.bf16.msra.mxu0 0
  %90 = vmatprep.subr.bf16.mxu0 0
  %91 = vmatpush1.bf16.msra.mxu0 0
  %92 = vmatprep.subr.bf16.mxu0 0
  %93 = vmatpush1.bf16.msra.mxu0 0
  %94 = vmatprep.subr.bf16.mxu0 0
  %95 = vmatpush1.bf16.msra.mxu0 0
  %96 = vmatprep.subr.bf16.mxu0 0
  %97 = vmatpush1.bf16.msra.mxu0 0
  %98 = vmatprep.subr.bf16.mxu0 0
  %99 = vmatpush1.bf16.msra.mxu0 %v80
  %100 = vmatprep.subr.bf16.mxu0 0
  %101 = vmatpush1.bf16.msra.mxu0 %v79
  %102 = vmatprep.subr.bf16.mxu0 0
  %103 = vmatpush2.bf16.msra.mxu0 0
  %104 = vmatprep.subr.bf16.mxu0 0
  %105 = vmatpush2.bf16.msra.mxu0 0
  %106 = vmatprep.subr.bf16.mxu0 0
  %107 = vmatpush2.bf16.msra.mxu0 0
  %108 = vmatprep.subr.bf16.mxu0 0
  %109 = vmatpush2.bf16.msra.mxu0 0
  %110 = vmatprep.subr.bf16.mxu0 0
  %111 = vmatpush2.bf16.msra.mxu0 0
  %112 = vmatprep.subr.bf16.mxu0 0
  %113 = vmatpush2.bf16.msra.mxu0 0
  %114 = vmatprep.subr.bf16.mxu0 0
  %115 = vmatpush2.bf16.msra.mxu0 0
  %116 = vmatprep.subr.bf16.mxu0 0
  %117 = vmatpush2.bf16.msra.mxu0 0
  %118 = vmatprep.mubr.bf16.mxu0 0
  %119 = vmatmul.mubr.bf16.gmra.mxu0 %v84
  %v120 = vpop.f32.mrf.mxu0
  %v121 = vadd.f32 0.0, %v120
  %v122 = vpop.f32.mrf.mxu0
  %v123 = vpop.f32.mrf.mxu0
  %v124 = vadd.f32 0.0, %v123
  %v125 = vpop.f32.mrf.mxu0
  %126 = vdwg.mxu0
  %vm127 = vcmask 785408
  %128 = vst.msk [vmem:[%s4] sm:$0xff] %vm127, %v121
  %129 = vst.msk [vmem:[%s4 + $0x8] sm:$0xff] %vm127, %v124
  // Predicated region
  $region18: #{_lambda_.7} parent=0 // pred_check
    _
  $region19: #{_lambda_.7} parent=0 // pred_check_branch
    %131 = sbr.rel (0) target = $region21
  $region20: #{_lambda_.7} parent=0 // pred_region
    _
  $region21: #{_lambda_.7} parent=0 // pred_fallthru
    _
  // Predicated region
  $region22: #{_lambda_.7} parent=0 // pred_check
    _
  $region23: #{_lambda_.7} parent=0 // pred_check_branch
    %133 = sbr.rel (0) target = $region25
  $region24: #{_lambda_.7} parent=0 // pred_region
    _
  $region25: #{_lambda_.7} parent=0 // pred_fallthru
    _

// kernel: _lambda_.13
$region0: #{_lambda_.13}
  #allocation0 [shape = 'u32[]', space=smem, size = 0x4, offset = 0x4, fixed_abs, tag = 'smem constant byte address 0x4 - core index']
  #allocation1 [shape = 'u32[144,128]{1,0:T(1,128)}', space=vmem, size = 0x12000, scoped, tag = 'internal scratch']
  %s0 = inlined_call_operand.vmem [shape: f32[16,32], index: 0, kind: input, shape index: {}]
  %s1 = inlined_call_operand.vmem [shape: f32[1,32], index: 1, kind: input, shape index: {}]
  %s2 = inlined_call_operand.vmem [shape: f32[1,32], index: 2, kind: input, shape index: {}]
  %s3 = inlined_call_operand.vmem [shape: bf16[32,128], index: 3, kind: input, shape index: {}]
  %s4 = inlined_call_operand.hbm [shape: f32[16,128], index: 4, kind: output, shape index: {}]
  %s5 = sld [smem:[#allocation0]]
  $region26: #{_lambda_.13} parent=0
    _
  %s7 = ssub.s32 1, %s5
  %s8 = scalar_select 0, %s7, %s5
  $region1: #{_lambda_.13} parent=0
    #allocation2 [shape = 'u8[8192]{0}', space=vmem, size = 0x2000, scoped, tag = 'output window, operand 0, single buffered']
    #allocation3 [shape = 's32[1]{0}', space=sflag, size = 0x4, scoped, tag = 'scoped memory for _lambda_.13']
    %9 = vsyncpa [#allocation3], 0
    // Predicated region
    $region2: #{_lambda_.13} parent=1 // pred_check
      _
    $region3: #{_lambda_.13} parent=1 // pred_check_branch
      %11 = sbr.rel (0) target = $region5
    $region4: #{_lambda_.13} parent=1 // pred_region
      _
    $region5: #{_lambda_.13} parent=1 // pred_fallthru
      _
    // Predicated region
    $region6: #{_lambda_.13} parent=1 // pred_check
      _
    $region7: #{_lambda_.13} parent=1 // pred_check_branch
      %13 = sbr.rel (0) target = $region9
    $region8: #{_lambda_.13} parent=1 // pred_region
      _
    $region9: #{_lambda_.13} parent=1 // pred_fallthru
      _
    // Predicated region
    $region10: #{_lambda_.13} parent=1 // pred_check
      _
    $region11: #{_lambda_.13} parent=1 // pred_check_branch
      %15 = sbr.rel (0) target = $region13
    $region12: #{_lambda_.13} parent=1 // pred_region
      _
    $region13: #{_lambda_.13} parent=1 // pred_fallthru
      _
    // Predicated region
    $region14: #{_lambda_.13} parent=1 // pred_check
      _
    $region15: #{_lambda_.13} parent=1 // pred_check_branch
      %17 = sbr.rel (0) target = $region17
    $region16: #{_lambda_.13} parent=1 // pred_region
      _
    $region17: #{_lambda_.13} parent=1 // pred_fallthru
      _
    %v19 = vld [vmem:[%s0] sm:$0xff]
    %v20 = vld [vmem:[%s0 + $0x8] sm:$0xff]
    %v21 = vld [vmem:[%s1] sm:$0x1]
    %v22 = vld [vmem:[%s2] sm:$0x1]
    %vm23 = vcmask 261120
    %v24 = vsel %vm23, %v19, 0.0
    %25 = vadd.xlane.f32.xlu0 %v24
    %v26 = vpop.xlane.xlu0 %25
    %v27 = vsel %vm23, %v20, 0.0
    %28 = vadd.xlane.f32.xlu0 %v27
    %v29 = vpop.xlane.xlu0 %28
    %v30 = vrcp.pop 32.0
    %v31 = vmul.f32 %v26, %v30
    %v32 = vmul.f32 %v29, %v30
    %v33 = vsub.f32 %v19, %v31
    %v34 = vsub.f32 %v20, %v32
    %v35 = vmul.f32 %v33, %v33
    %v36 = vmul.f32 %v34, %v34
    %v37 = vsel %vm23, %v35, 0.0
    %38 = vadd.xlane.f32.xlu0 %v37
    %v39 = vpop.xlane.xlu0 %38
    %v40 = vsel %vm23, %v36, 0.0
    %41 = vadd.xlane.f32.xlu0 %v40
    %v42 = vpop.xlane.xlu0 %41
    %v43 = vmul.f32 %v39, %v30
    %v44 = vmul.f32 %v42, %v30
    %v45 = vadd.f32 %v43, 1e-05
    %v46 = vadd.f32 %v44, 1e-05
    %v47 = vrsqrt.pop %v45
    %v48 = vrsqrt.pop %v46
    %v49 = vmul.f32 %v33, %v47
    %v50 = vmul.f32 %v34, %v48
    %v52 = vlaneseq
    %v53 = vshrl.u32 %v52, 7
    %v54 = vsub.s32 0, %v53
    %v55 = vrot.slane %v21, %v54
    %v57 = vmul.f32 %v55, %v49
    %v58 = vmul.f32 %v55, %v50
    %v60 = vlaneseq
    %v61 = vshrl.u32 %v60, 7
    %v62 = vsub.s32 0, %v61
    %v63 = vrot.slane %v22, %v62
    %v65 = vadd.f32 %v57, %v63
    %v66 = vadd.f32 %v58, %v63
    %v67 = vpack.c.bf16 %v66, %v65
    %v68 = vld [vmem:[%s3] sm:$0xf]
    %v69 = vld [vmem:[%s3 + $0x4] sm:$0xf]
    %v70 = vld [vmem:[%s3 + $0x8] sm:$0xf]
    %v71 = vld [vmem:[%s3 + $0xc] sm:$0xf]
    %v76 = vunpack.c.l.b16 %v68
    %v77 = vunpack.c.l.b16 %v69
    %v78 = vunpack.c.l.b16 %v70
    %v79 = vunpack.c.l.b16 %v71
    %v80 = vpack.c.b16 %v77, %v76
    %v81 = vpack.c.b16 %v79, %v78
    %v85 = vsel %vm23, %v67, 0
    %87 = vmatprep.subr.bf16.mxu0 0
    %88 = vmatpush1.bf16.msra.mxu0 0
    %89 = vmatprep.subr.bf16.mxu0 0
    %90 = vmatpush1.bf16.msra.mxu0 0
    %91 = vmatprep.subr.bf16.mxu0 0
    %92 = vmatpush1.bf16.msra.mxu0 0
    %93 = vmatprep.subr.bf16.mxu0 0
    %94 = vmatpush1.bf16.msra.mxu0 0
    %95 = vmatprep.subr.bf16.mxu0 0
    %96 = vmatpush1.bf16.msra.mxu0 0
    %97 = vmatprep.subr.bf16.mxu0 0
    %98 = vmatpush1.bf16.msra.mxu0 0
    %99 = vmatprep.subr.bf16.mxu0 0
    %100 = vmatpush1.bf16.msra.mxu0 %v81
    %101 = vmatprep.subr.bf16.mxu0 0
    %102 = vmatpush1.bf16.msra.mxu0 %v80
    %103 = vmatprep.subr.bf16.mxu0 0
    %104 = vmatpush2.bf16.msra.mxu0 0
    %105 = vmatprep.subr.bf16.mxu0 0
    %106 = vmatpush2.bf16.msra.mxu0 0
    %107 = vmatprep.subr.bf16.mxu0 0
    %108 = vmatpush2.bf16.msra.mxu0 0
    %109 = vmatprep.subr.bf16.mxu0 0
    %110 = vmatpush2.bf16.msra.mxu0 0
    %111 = vmatprep.subr.bf16.mxu0 0
    %112 = vmatpush2.bf16.msra.mxu0 0
    %113 = vmatprep.subr.bf16.mxu0 0
    %114 = vmatpush2.bf16.msra.mxu0 0
    %115 = vmatprep.subr.bf16.mxu0 0
    %116 = vmatpush2.bf16.msra.mxu0 0
    %117 = vmatprep.subr.bf16.mxu0 0
    %118 = vmatpush2.bf16.msra.mxu0 0
    %119 = vmatprep.mubr.bf16.mxu0 0
    %120 = vmatmul.mubr.bf16.gmra.mxu0 %v85
    %v121 = vpop.f32.mrf.mxu0
    %v122 = vadd.f32 0.0, %v121
    %v123 = vpop.f32.mrf.mxu0
    %v124 = vpop.f32.mrf.mxu0
    %v125 = vadd.f32 0.0, %v124
    %v126 = vpop.f32.mrf.mxu0
    %127 = vdwg.mxu0
    %128 = vst [vmem:[#allocation2] sm:$0xff] %v122
    %129 = vst [vmem:[#allocation2 + $0x8] sm:$0xff] %v125
    // Predicated region
    $region18: #{_lambda_.13} parent=1 // pred_check
      _
    $region19: #{_lambda_.13} parent=1 // pred_check_branch
      %131 = sbr.rel (0) target = $region21
    $region20: #{_lambda_.13} parent=1 // pred_region
      %s133 = ssub.s32 256, 256
      %134 = vsyncadd [#allocation3], %s133
      %s135 = sshll.u32 [#allocation2], 4
      %s136 = int_to_ptr.vmem [resolvable:$true] %s135
      %141 = dma.vmem_to_hbm [thread:$0]  %s136, 256, %s4, [#allocation3], 128, 128, 8
    $region21: #{_lambda_.13} parent=1 // pred_fallthru
      _
    // Predicated region
    $region22: #{_lambda_.13} parent=1 // pred_check
      _
    $region23: #{_lambda_.13} parent=1 // pred_check_branch
      %143 = sbr.rel (0) target = $region25
    $region24: #{_lambda_.13} parent=1 // pred_region
      %144 = dma.done [#allocation3], 256
    $region25: #{_lambda_.13} parent=1 // pred_fallthru
      _
    %145 = vsyncpa [#allocation3], 1

// kernel: _lambda_.9
$region0: #{_lambda_.9}
  #allocation0 [shape = 'u32[]', space=smem, size = 0x4, offset = 0x4, fixed_abs, tag = 'smem constant byte address 0x4 - core index']
  #allocation1 [shape = 'u32[144,128]{1,0:T(1,128)}', space=vmem, size = 0x12000, scoped, tag = 'internal scratch']
  %s0 = inlined_call_operand.vmem [shape: f32[16,32], index: 0, kind: input, shape index: {}]
  %s1 = inlined_call_operand.vmem [shape: f32[1,32], index: 1, kind: input, shape index: {}]
  %s2 = inlined_call_operand.vmem [shape: f32[1,32], index: 2, kind: input, shape index: {}]
  %s3 = inlined_call_operand.vmem [shape: f32[1,32], index: 3, kind: input, shape index: {}]
  %s4 = inlined_call_operand.vmem [shape: f32[32,32], index: 4, kind: input, shape index: {}]
  %s5 = inlined_call_operand.vmem [shape: f32[1,32], index: 5, kind: input, shape index: {}]
  %s6 = inlined_call_operand.vmem [shape: bf16[32,32], index: 6, kind: input, shape index: {}]
  %s7 = inlined_call_operand.vmem [shape: f32[1,32], index: 7, kind: input, shape index: {}]
  %s8 = inlined_call_operand.vmem [shape: f32[16,32], index: 8, kind: output, shape index: {}]
  %s9 = sld [smem:[#allocation0]]
  $region42: #{_lambda_.9} parent=0
    _
  %s11 = ssub.s32 1, %s9
  %s12 = scalar_select 0, %s11, %s9
  // Predicated region
  $region2: #{_lambda_.9} parent=0 // pred_check
    _
  $region3: #{_lambda_.9} parent=0 // pred_check_branch
    %14 = sbr.rel (0) target = $region5
  $region4: #{_lambda_.9} parent=0 // pred_region
    _
  $region5: #{_lambda_.9} parent=0 // pred_fallthru
    _
  // Predicated region
  $region6: #{_lambda_.9} parent=0 // pred_check
    _
  $region7: #{_lambda_.9} parent=0 // pred_check_branch
    %16 = sbr.rel (0) target = $region9
  $region8: #{_lambda_.9} parent=0 // pred_region
    _
  $region9: #{_lambda_.9} parent=0 // pred_fallthru
    _
  // Predicated region
  $region10: #{_lambda_.9} parent=0 // pred_check
    _
  $region11: #{_lambda_.9} parent=0 // pred_check_branch
    %18 = sbr.rel (0) target = $region13
  $region12: #{_lambda_.9} parent=0 // pred_region
    _
  $region13: #{_lambda_.9} parent=0 // pred_fallthru
    _
  // Predicated region
  $region14: #{_lambda_.9} parent=0 // pred_check
    _
  $region15: #{_lambda_.9} parent=0 // pred_check_branch
    %20 = sbr.rel (0) target = $region17
  $region16: #{_lambda_.9} parent=0 // pred_region
    _
  $region17: #{_lambda_.9} parent=0 // pred_fallthru
    _
  // Predicated region
  $region18: #{_lambda_.9} parent=0 // pred_check
    _
  $region19: #{_lambda_.9} parent=0 // pred_check_branch
    %22 = sbr.rel (0) target = $region21
  $region20: #{_lambda_.9} parent=0 // pred_region
    _
  $region21: #{_lambda_.9} parent=0 // pred_fallthru
    _
  // Predicated region
  $region22: #{_lambda_.9} parent=0 // pred_check
    _
  $region23: #{_lambda_.9} parent=0 // pred_check_branch
    %24 = sbr.rel (0) target = $region25
  $region24: #{_lambda_.9} parent=0 // pred_region
    _
  $region25: #{_lambda_.9} parent=0 // pred_fallthru
    _
  // Predicated region
  $region26: #{_lambda_.9} parent=0 // pred_check
    _
  $region27: #{_lambda_.9} parent=0 // pred_check_branch
    %26 = sbr.rel (0) target = $region29
  $region28: #{_lambda_.9} parent=0 // pred_region
    _
  $region29: #{_lambda_.9} parent=0 // pred_fallthru
    _
  // Predicated region
  $region30: #{_lambda_.9} parent=0 // pred_check
    _
  $region31: #{_lambda_.9} parent=0 // pred_check_branch
    %28 = sbr.rel (0) target = $region33
  $region32: #{_lambda_.9} parent=0 // pred_region
    _
  $region33: #{_lambda_.9} parent=0 // pred_fallthru
    _
  %v30 = vld [vmem:[%s0] sm:$0xff]
  %v31 = vld [vmem:[%s0 + $0x8] sm:$0xff]
  %v32 = vld [vmem:[%s1] sm:$0x1]
  %v33 = vld [vmem:[%s2] sm:$0x1]
  %vm34 = vcmask 261120
  %v35 = vsel %vm34, %v30, 0.0
  %36 = vadd.xlane.f32.xlu0 %v35
  %v37 = vpop.xlane.xlu0 %36
  %v38 = vsel %vm34, %v31, 0.0
  %39 = vadd.xlane.f32.xlu0 %v38
  %v40 = vpop.xlane.xlu0 %39
  %v41 = vrcp.pop 32.0
  %v42 = vmul.f32 %v37, %v41
  %v43 = vmul.f32 %v40, %v41
  %v44 = vsub.f32 %v30, %v42
  %v45 = vsub.f32 %v31, %v43
  %v46 = vmul.f32 %v44, %v44
  %v47 = vmul.f32 %v45, %v45
  %v48 = vsel %vm34, %v46, 0.0
  %49 = vadd.xlane.f32.xlu0 %v48
  %v50 = vpop.xlane.xlu0 %49
  %v51 = vsel %vm34, %v47, 0.0
  %52 = vadd.xlane.f32.xlu0 %v51
  %v53 = vpop.xlane.xlu0 %52
  %v54 = vmul.f32 %v50, %v41
  %v55 = vmul.f32 %v53, %v41
  %v56 = vadd.f32 %v54, 1e-05
  %v57 = vadd.f32 %v55, 1e-05
  %v58 = vrsqrt.pop %v56
  %v59 = vrsqrt.pop %v57
  %v60 = vmul.f32 %v44, %v58
  %v61 = vmul.f32 %v45, %v59
  %v63 = vlaneseq
  %v64 = vshrl.u32 %v63, 7
  %v65 = vsub.s32 0, %v64
  %v66 = vrot.slane %v32, %v65
  %v68 = vmul.f32 %v66, %v60
  %v69 = vmul.f32 %v66, %v61
  %v71 = vlaneseq
  %v72 = vshrl.u32 %v71, 7
  %v73 = vsub.s32 0, %v72
  %v74 = vrot.slane %v33, %v73
  %v76 = vadd.f32 %v68, %v74
  %v77 = vadd.f32 %v69, %v74
  %v78 = vld [vmem:[%s3] sm:$0x1]
  %v80 = vlaneseq
  %v81 = vshrl.u32 %v80, 7
  %v82 = vsub.s32 0, %v81
  %v83 = vrot.slane %v78, %v82
  %v85 = vmul.f32 %v76, %v83
  %v86 = vmul.f32 %v77, %v83
  %v87 = vmul.f32 %v85, %v85
  %v88 = vmul.f32 %v86, %v86
  %v89 = vsel %vm34, %v87, 0.0
  %90 = vadd.xlane.f32.xlu0 %v89
  %v91 = vpop.xlane.xlu0 %90
  %v92 = vsel %vm34, %v88, 0.0
  %93 = vadd.xlane.f32.xlu0 %v92
  %v94 = vpop.xlane.xlu0 %93
  %v95 = vld [vmem:[%s4] sm:$0xff]
  %v96 = vld [vmem:[%s4 + $0x8] sm:$0xff]
  %v97 = vld [vmem:[%s4 + $0x10] sm:$0xff]
  %v98 = vld [vmem:[%s4 + $0x18] sm:$0xff]
  %v100 = vsel %vm34, %v85, 0
  %v103 = vsel %vm34, %v86, 0
  %105 = vmatprep.subr.mxu0 0.0
  %106 = vmatpush1.msra.mxu0 0.0
  %107 = vmatprep.subr.mxu0 0.0
  %108 = vmatpush1.msra.mxu0 0.0
  %109 = vmatprep.subr.mxu0 0.0
  %110 = vmatpush1.msra.mxu0 0.0
  %111 = vmatprep.subr.mxu0 0.0
  %112 = vmatpush1.msra.mxu0 0.0
  %113 = vmatprep.subr.mxu0 0.0
  %114 = vmatpush1.msra.mxu0 0.0
  %115 = vmatprep.subr.mxu0 0.0
  %116 = vmatpush1.msra.mxu0 0.0
  %117 = vmatprep.subr.mxu0 0.0
  %118 = vmatpush1.msra.mxu0 0.0
  %119 = vmatprep.subr.mxu0 0.0
  %120 = vmatpush1.msra.mxu0 0.0
  %121 = vmatprep.subr.mxu0 0.0
  %122 = vmatpush1.msra.mxu0 0.0
  %123 = vmatprep.subr.mxu0 0.0
  %124 = vmatpush1.msra.mxu0 0.0
  %125 = vmatprep.subr.mxu0 0.0
  %126 = vmatpush1.msra.mxu0 0.0
  %127 = vmatprep.subr.mxu0 0.0
  %128 = vmatpush1.msra.mxu0 0.0
  %129 = vmatprep.subr.mxu0 0.0
  %130 = vmatpush1.msra.mxu0 %v98
  %131 = vmatprep.subr.mxu0 0.0
  %132 = vmatpush1.msra.mxu0 %v97
  %133 = vmatprep.subr.mxu0 0.0
  %134 = vmatpush1.msra.mxu0 %v96
  %135 = vmatprep.subr.mxu0 0.0
  %136 = vmatpush1.msra.mxu0 %v95
  %137 = vmatprep.subr.mxu0 0.0
  %138 = vmatpush2.msra.mxu0 0.0
  %139 = vmatprep.subr.mxu0 0.0
  %140 = vmatpush2.msra.mxu0 0.0
  %141 = vmatprep.subr.mxu0 0.0
  %142 = vmatpush2.msra.mxu0 0.0
  %143 = vmatprep.subr.mxu0 0.0
  %144 = vmatpush2.msra.mxu0 0.0
  %145 = vmatprep.subr.mxu0 0.0
  %146 = vmatpush2.msra.mxu0 0.0
  %147 = vmatprep.subr.mxu0 0.0
  %148 = vmatpush2.msra.mxu0 0.0
  %149 = vmatprep.subr.mxu0 0.0
  %150 = vmatpush2.msra.mxu0 0.0
  %151 = vmatprep.subr.mxu0 0.0
  %152 = vmatpush2.msra.mxu0 0.0
  %153 = vmatprep.subr.mxu0 0.0
  %154 = vmatpush2.msra.mxu0 0.0
  %155 = vmatprep.subr.mxu0 0.0
  %156 = vmatpush2.msra.mxu0 0.0
  %157 = vmatprep.subr.mxu0 0.0
  %158 = vmatpush2.msra.mxu0 0.0
  %159 = vmatprep.subr.mxu0 0.0
  %160 = vmatpush2.msra.mxu0 0.0
  %161 = vmatprep.subr.mxu0 0.0
  %162 = vmatpush2.msra.mxu0 0.0
  %163 = vmatprep.subr.mxu0 0.0
  %164 = vmatpush2.msra.mxu0 0.0
  %165 = vmatprep.subr.mxu0 0.0
  %166 = vmatpush2.msra.mxu0 0.0
  %167 = vmatprep.subr.mxu0 0.0
  %168 = vmatpush2.msra.mxu0 0.0
  %169 = vmatprep.mubr.f32.mxu0 0.0
  %170 = vmatmul.mubr.f32.gmra.mxu0 %v100
  %v171 = vpop.f32.mrf.mxu0
  %v172 = vadd.f32 0.0, %v171
  %v173 = vpop.f32.mrf.mxu0
  %174 = vmatprep.mubr.f32.mxu0 0.0
  %175 = vmatmul.mubr.f32.gmra.mxu0 %v103
  %v176 = vpop.f32.mrf.mxu0
  %v177 = vadd.f32 0.0, %v176
  %v178 = vpop.f32.mrf.mxu0
  %179 = vdwg.mxu0
  %v180 = vld [vmem:[%s5] sm:$0x1]
  %v182 = vlaneseq
  %v183 = vshrl.u32 %v182, 7
  %v184 = vsub.s32 0, %v183
  %v185 = vrot.slane %v180, %v184
  %v187 = vadd.f32 %v91, %v185
  %v188 = vadd.f32 %v94, %v185
  %v189 = vmul.f32 %v172, 2.0
  %v190 = vmul.f32 %v177, 2.0
  %v191 = vsub.f32 %v187, %v189
  %v192 = vsub.f32 %v188, %v190
  %v193 = vmax.f32 %v191, 0.0
  %v194 = vmax.f32 %v192, 0.0
  %v195 = vmul.f32 %v193, -0.5
  %v196 = vmul.f32 %v194, -0.5
  %v197 = vmul.f32 %v195, 1.442695
  %v198 = vpow.pop %v197
  %v199 = vmul.f32 %v196, 1.442695
  %v200 = vpow.pop %v199
  %v201 = vpack.c.bf16 %v200, %v198
  %v202 = vld [vmem:[%s6] sm:$0xf]
  %v203 = vld [vmem:[%s6 + $0x4] sm:$0xf]
  %v204 = vld [vmem:[%s6 + $0x8] sm:$0xf]
  %v205 = vld [vmem:[%s6 + $0xc] sm:$0xf]
  %v210 = vunpack.c.l.b16 %v202
  %v211 = vunpack.c.l.b16 %v203
  %v212 = vunpack.c.l.b16 %v204
  %v213 = vunpack.c.l.b16 %v205
  %v214 = vpack.c.b16 %v211, %v210
  %v215 = vpack.c.b16 %v213, %v212
  %v219 = vsel %vm34, %v201, 0
  %221 = vmatprep.subr.bf16.mxu0 0
  %222 = vmatpush1.bf16.msra.mxu0 0
  %223 = vmatprep.subr.bf16.mxu0 0
  %224 = vmatpush1.bf16.msra.mxu0 0
  %225 = vmatprep.subr.bf16.mxu0 0
  %226 = vmatpush1.bf16.msra.mxu0 0
  %227 = vmatprep.subr.bf16.mxu0 0
  %228 = vmatpush1.bf16.msra.mxu0 0
  %229 = vmatprep.subr.bf16.mxu0 0
  %230 = vmatpush1.bf16.msra.mxu0 0
  %231 = vmatprep.subr.bf16.mxu0 0
  %232 = vmatpush1.bf16.msra.mxu0 0
  %233 = vmatprep.subr.bf16.mxu0 0
  %234 = vmatpush1.bf16.msra.mxu0 %v215
  %235 = vmatprep.subr.bf16.mxu0 0
  %236 = vmatpush1.bf16.msra.mxu0 %v214
  %237 = vmatprep.subr.bf16.mxu0 0
  %238 = vmatpush2.bf16.msra.mxu0 0
  %239 = vmatprep.subr.bf16.mxu0 0
  %240 = vmatpush2.bf16.msra.mxu0 0
  %241 = vmatprep.subr.bf16.mxu0 0
  %242 = vmatpush2.bf16.msra.mxu0 0
  %243 = vmatprep.subr.bf16.mxu0 0
  %244 = vmatpush2.bf16.msra.mxu0 0
  %245 = vmatprep.subr.bf16.mxu0 0
  %246 = vmatpush2.bf16.msra.mxu0 0
  %247 = vmatprep.subr.bf16.mxu0 0
  %248 = vmatpush2.bf16.msra.mxu0 0
  %249 = vmatprep.subr.bf16.mxu0 0
  %250 = vmatpush2.bf16.msra.mxu0 0
  %251 = vmatprep.subr.bf16.mxu0 0
  %252 = vmatpush2.bf16.msra.mxu0 0
  %253 = vmatprep.mubr.bf16.mxu0 0
  %254 = vmatmul.mubr.bf16.gmra.mxu0 %v219
  %v255 = vpop.f32.mrf.mxu0
  %v256 = vadd.f32 0.0, %v255
  %v257 = vpop.f32.mrf.mxu0
  %v258 = vpop.f32.mrf.mxu0
  %v259 = vadd.f32 0.0, %v258
  %v260 = vpop.f32.mrf.mxu0
  %261 = vdwg.mxu0
  %v262 = vadd.f32 %v30, %v256
  %v263 = vadd.f32 %v31, %v259
  %v264 = vld [vmem:[%s7] sm:$0x1]
  %v266 = vlaneseq
  %v267 = vshrl.u32 %v266, 7
  %v268 = vsub.s32 0, %v267
  %v269 = vrot.slane %v264, %v268
  %v271 = vadd.f32 %v262, %v269
  %v272 = vadd.f32 %v263, %v269
  %273 = vst.msk [vmem:[%s8] sm:$0xff] %vm34, %v271
  %274 = vst.msk [vmem:[%s8 + $0x8] sm:$0xff] %vm34, %v272
  // Predicated region
  $region34: #{_lambda_.9} parent=0 // pred_check
    _
  $region35: #{_lambda_.9} parent=0 // pred_check_branch
    %276 = sbr.rel (0) target = $region37
  $region36: #{_lambda_.9} parent=0 // pred_region
    _
  $region37: #{_lambda_.9} parent=0 // pred_fallthru
    _
  // Predicated region
  $region38: #{_lambda_.9} parent=0 // pred_check
    _
  $region39: #{_lambda_.9} parent=0 // pred_check_branch
    %278 = sbr.rel (0) target = $region41
  $region40: #{_lambda_.9} parent=0 // pred_region
    _
  $region41: #{_lambda_.9} parent=0 // pred_fallthru
    _

// kernel: _lambda_.8
$region0: #{_lambda_.8}
  #allocation0 [shape = 'u32[]', space=smem, size = 0x4, offset = 0x4, fixed_abs, tag = 'smem constant byte address 0x4 - core index']
  #allocation1 [shape = 'u32[144,128]{1,0:T(1,128)}', space=vmem, size = 0x12000, scoped, tag = 'internal scratch']
  %s0 = inlined_call_operand.vmem [shape: f32[2,8,96], index: 0, kind: input, shape index: {}]
  %s1 = inlined_call_operand.vmem [shape: bf16[32,32], index: 1, kind: input, shape index: {}]
  %s2 = inlined_call_operand.vmem [shape: f32[1,32], index: 2, kind: input, shape index: {}]
  %s3 = inlined_call_operand.vmem [shape: f32[2,8,32], index: 3, kind: input, shape index: {}]
  %s4 = inlined_call_operand.vmem [shape: f32[2,8,32], index: 4, kind: output, shape index: {}]
  %s5 = sld [smem:[#allocation0]]
  $region49: #{_lambda_.8} parent=0
    _
  %s7 = ssub.s32 1, %s5
  %s8 = scalar_select 0, %s7, %s5
  loop: start=0, step=1, limit=4
  $region2: #{_lambda_.8} parent=0 // loop_pre_header
    _
  $region3: #{_lambda_.8} parent=0 // loop_header
    %s10 = sphi 0, %s14
    %p11 = scmp.ge.s32.totalorder %s10, 4
    %s20 = sphi 0, %s22
    %s23 = sphi 0, %s20
    %s24 = sphi 0, %s23
    %s40 = sphi 0, %s24
    %s44 = sphi 0, %s44
    %s46 = sphi 0, %s44
    %s47 = sphi 0, %s46
    %s61 = sphi 0, %s47
    %s65 = sphi 0, %s65
    %s67 = sphi 0, %s65
    %s68 = sphi 0, %s67
    %s82 = sphi 0, %s68
    %s88 = sphi 0, %s90
    %s91 = sphi 0, %s88
    %s92 = sphi 0, %s91
    %s108 = sphi 0, %s92
    %s114 = sphi 0, %s116
    %s117 = sphi 0, %s114
    %s118 = sphi 0, %s117
    %s134 = sphi 0, %s118
  $region4: #{_lambda_.8} parent=0 // loop_header_branch
    %13 = sbr.rel (%p11) target = $region8
  $region5: #{_lambda_.8} parent=0 // loop_body
    %s15 = ssub.s32 %s10, 1
    %s16 = ssub.s32 %s10, 2
    %s17 = sadd.s32 %s10, 1
    %s18 = ssub.s32 %s10, %s17
    %p19 = scmp.eq.s32.totalorder %s18, 0
    %s21 = sadd.s32 %s20, 1
    %s22 = scalar_select %p19, %s20, %s21
    %p25 = pneg %p19
    %p26 = scmp.eq.s32.totalorder %s10, 1
    %p27 = por %p25, %p26
    %p28 = scmp.ne.s32.totalorder %s20, %s23
    %p29 = scmp.eq.s32.totalorder %s10, 0
    %p30 = por %p28, %p29
    %p31 = scmp.ne.s32.totalorder %s20, %s23
    %p32 = scmp.eq.s32.totalorder %s15, 1
    %p33 = por %p31, %p32
    %p34 = scmp.ne.s32.totalorder %s23, %s24
    %p35 = scmp.eq.s32.totalorder %s15, 0
    %p36 = por %p34, %p35
    %p37 = scmp.ne.s32.totalorder %s23, %s24
    %p38 = scmp.eq.s32.totalorder %s16, 1
    %p39 = por %p37, %p38
    %p41 = scmp.ne.s32.totalorder %s24, %s40
    %p42 = scmp.eq.s32.totalorder %s16, 0
    %p43 = por %p41, %p42
    %s45 = sadd.s32 %s44, 1
    %p48 = scmp.eq.s32.totalorder %s10, 1
    %p49 = scmp.ne.s32.totalorder %s44, %s46
    %p50 = scmp.eq.s32.totalorder %s10, 0
    %p51 = por %p49, %p50
    %p52 = scmp.ne.s32.totalorder %s44, %s46
    %p53 = scmp.eq.s32.totalorder %s15, 1
    %p54 = por %p52, %p53
    %p55 = scmp.ne.s32.totalorder %s46, %s47
    %p56 = scmp.eq.s32.totalorder %s15, 0
    %p57 = por %p55, %p56
    %p58 = scmp.ne.s32.totalorder %s46, %s47
    %p59 = scmp.eq.s32.totalorder %s16, 1
    %p60 = por %p58, %p59
    %p62 = scmp.ne.s32.totalorder %s47, %s61
    %p63 = scmp.eq.s32.totalorder %s16, 0
    %p64 = por %p62, %p63
    %s66 = sadd.s32 %s65, 1
    %p69 = scmp.eq.s32.totalorder %s10, 1
    %p70 = scmp.ne.s32.totalorder %s65, %s67
    %p71 = scmp.eq.s32.totalorder %s10, 0
    %p72 = por %p70, %p71
    %p73 = scmp.ne.s32.totalorder %s65, %s67
    %p74 = scmp.eq.s32.totalorder %s15, 1
    %p75 = por %p73, %p74
    %p76 = scmp.ne.s32.totalorder %s67, %s68
    %p77 = scmp.eq.s32.totalorder %s15, 0
    %p78 = por %p76, %p77
    %p79 = scmp.ne.s32.totalorder %s67, %s68
    %p80 = scmp.eq.s32.totalorder %s16, 1
    %p81 = por %p79, %p80
    %p83 = scmp.ne.s32.totalorder %s68, %s82
    %p84 = scmp.eq.s32.totalorder %s16, 0
    %p85 = por %p83, %p84
    %s86 = ssub.s32 %s10, %s17
    %p87 = scmp.eq.s32.totalorder %s86, 0
    %s89 = sadd.s32 %s88, 1
    %s90 = scalar_select %p87, %s88, %s89
    %p93 = pneg %p87
    %p94 = scmp.eq.s32.totalorder %s10, 1
    %p95 = por %p93, %p94
    %p96 = scmp.ne.s32.totalorder %s88, %s91
    %p97 = scmp.eq.s32.totalorder %s10, 0
    %p98 = por %p96, %p97
    %p99 = scmp.ne.s32.totalorder %s88, %s91
    %p100 = scmp.eq.s32.totalorder %s15, 1
    %p101 = por %p99, %p100
    %p102 = scmp.ne.s32.totalorder %s91, %s92
    %p103 = scmp.eq.s32.totalorder %s15, 0
    %p104 = por %p102, %p103
    %p105 = scmp.ne.s32.totalorder %s91, %s92
    %p106 = scmp.eq.s32.totalorder %s16, 1
    %p107 = por %p105, %p106
    %p109 = scmp.ne.s32.totalorder %s92, %s108
    %p110 = scmp.eq.s32.totalorder %s16, 0
    %p111 = por %p109, %p110
    %s112 = ssub.s32 %s10, %s17
    %p113 = scmp.eq.s32.totalorder %s112, 0
    %s115 = sadd.s32 %s114, 1
    %s116 = scalar_select %p113, %s114, %s115
    %p119 = pneg %p113
    %p120 = scmp.eq.s32.totalorder %s10, 1
    %p121 = por %p119, %p120
    %p122 = scmp.ne.s32.totalorder %s114, %s117
    %p123 = scmp.eq.s32.totalorder %s10, 0
    %p124 = por %p122, %p123
    %p125 = scmp.ne.s32.totalorder %s114, %s117
    %p126 = scmp.eq.s32.totalorder %s15, 1
    %p127 = por %p125, %p126
    %p128 = scmp.ne.s32.totalorder %s117, %s118
    %p129 = scmp.eq.s32.totalorder %s15, 0
    %p130 = por %p128, %p129
    %p131 = scmp.ne.s32.totalorder %s117, %s118
    %p132 = scmp.eq.s32.totalorder %s16, 1
    %p133 = por %p131, %p132
    %p135 = scmp.ne.s32.totalorder %s118, %s134
    %p136 = scmp.eq.s32.totalorder %s16, 0
    %p137 = por %p135, %p136
    %p138 = scmp.le.s32.totalorder 1, %s10
    %p139 = scmp.lt.s32.totalorder %s10, 3
    %p140 = pnand %p138, %p139
    %p141 = pneg %p140
    // Predicated region
    $region9: #{_lambda_.8} parent=5 // pred_check
      _
    $region10: #{_lambda_.8} parent=5 // pred_check_branch
      %143 = sbr.rel (%p140) target = $region12
    $region11: #{_lambda_.8} parent=5 // pred_region
      %s144 = ssub.s32 %s10, 1
      // Predicated region
      $region13: #{_lambda_.8} parent=11 // pred_check
        %p145 = pneg %p57
      $region14: #{_lambda_.8} parent=11 // pred_check_branch
        %147 = sbr.rel (%p145) target = $region16
      $region15: #{_lambda_.8} parent=11 // pred_region
        _
      $region16: #{_lambda_.8} parent=11 // pred_fallthru
        _
      // Predicated region
      $region17: #{_lambda_.8} parent=11 // pred_check
        %p148 = pneg %p78
      $region18: #{_lambda_.8} parent=11 // pred_check_branch
        %150 = sbr.rel (%p148) target = $region20
      $region19: #{_lambda_.8} parent=11 // pred_region
        _
      $region20: #{_lambda_.8} parent=11 // pred_fallthru
        _
    $region12: #{_lambda_.8} parent=5 // pred_fallthru
      _
    %p151 = scmp.lt.s32.totalorder %s10, 2
    // Predicated region
    $region21: #{_lambda_.8} parent=5 // pred_check
      %p152 = pneg %p151
    $region22: #{_lambda_.8} parent=5 // pred_check_branch
      %154 = sbr.rel (%p152) target = $region24
    $region23: #{_lambda_.8} parent=5 // pred_region
      // Predicated region
      $region25: #{_lambda_.8} parent=23 // pred_check
        %p155 = pneg %p30
      $region26: #{_lambda_.8} parent=23 // pred_check_branch
        %157 = sbr.rel (%p155) target = $region28
      $region27: #{_lambda_.8} parent=23 // pred_region
        %p158 = scmp.lt.s32.totalorder %s10, 1
        %s159 = scalar_select %p158, %s10, 1
        %s160 = smul.addr %s159, 8
        %s161 = scalar_lea.vmem %s0, %s160
      $region28: #{_lambda_.8} parent=23 // pred_fallthru
        _
      // Predicated region
      $region29: #{_lambda_.8} parent=23 // pred_check
        %p162 = pneg %p98
      $region30: #{_lambda_.8} parent=23 // pred_check_branch
        %164 = sbr.rel (%p162) target = $region32
      $region31: #{_lambda_.8} parent=23 // pred_region
        %p165 = scmp.lt.s32.totalorder %s10, 1
        %s166 = scalar_select %p165, %s10, 1
        %s167 = smul.addr %s166, 8
        %s168 = scalar_lea.vmem %s3, %s167
      $region32: #{_lambda_.8} parent=23 // pred_fallthru
        _
    $region24: #{_lambda_.8} parent=5 // pred_fallthru
      _
    %p169 = scmp.le.s32.totalorder 1, %s10
    %p170 = scmp.lt.s32.totalorder %s10, 3
    %p171 = pnand %p169, %p170
    %p172 = pneg %p171
    // Predicated region
    $region33: #{_lambda_.8} parent=5 // pred_check
      _
    $region34: #{_lambda_.8} parent=5 // pred_check_branch
      %174 = sbr.rel (%p171) target = $region36
    $region35: #{_lambda_.8} parent=5 // pred_region
      %s175 = ssub.s32 %s10, 1
      %p176 = scmp.lt.s32.totalorder %s15, 1
      %s177 = scalar_select %p176, %s15, 1
      %s178 = smul.addr %s177, 8
      %s179 = scalar_lea.vmem %s0, %s178
      %p180 = pneg %p36
      %p181 = pneg %p33
      %p182 = pneg %p57
      %p183 = pneg %p54
      %p184 = pneg %p78
      %p185 = pneg %p75
      %p186 = scmp.lt.s32.totalorder %s15, 1
      %s187 = scalar_select %p186, %s15, 1
      %s188 = smul.addr %s187, 8
      %s189 = scalar_lea.vmem %s3, %s188
      %p190 = pneg %p104
      %p191 = pneg %p101
      %p192 = pneg %p130
      %p193 = pneg %p127
      %p194 = scmp.lt.s32.totalorder %s15, 1
      %s195 = scalar_select %p194, %s15, 1
      %s196 = smul.addr %s195, 8
      %s197 = scalar_lea.vmem %s4, %s196
      %p198 = scmp.lt.s32.totalorder %s15, 1
      %s199 = scalar_select %p198, %s15, 1
      %s200 = smul.addr %s199, 8
      %s201 = scalar_lea.vmem %s0, %s200
      %p202 = scmp.lt.s32.totalorder %s15, 1
      %s203 = scalar_select %p202, %s15, 1
      %s204 = smul.addr %s203, 8
      %s205 = scalar_lea.vmem %s3, %s204
      %p206 = scmp.lt.s32.totalorder %s15, 1
      %s207 = scalar_select %p206, %s15, 1
      %s208 = smul.addr %s207, 8
      %s209 = scalar_lea.vmem %s4, %s208
      %v211 = vld [vmem:[%s201] sm:$0xff]
      %v212 = vld [vmem:[%s1] sm:$0xf]
      %v213 = vld [vmem:[%s1 + $0x4] sm:$0xf]
      %v214 = vld [vmem:[%s1 + $0x8] sm:$0xf]
      %v215 = vld [vmem:[%s1 + $0xc] sm:$0xf]
      %v216 = vlaneseq
      %v217 = vshrl.u32 %v216, 7
      %v218 = vlaneseq
      %v219 = vand.u32 %v218, 127
      %vm220 = vcmp.gt.s32.totalorder %v219, %v217
      %v221 = vld [vmem:[%s205] sm:$0xff]
      %v222 = vld [vmem:[%s2] sm:$0x1]
      %v224 = vlaneseq
      %v225 = vshrl.u32 %v224, 7
      %v226 = vsub.s32 0, %v225
      %v227 = vrot.slane %v222, %v226
      %v229 = vadd.f32 %v221, %v227
      %v230 = vmul.f32 %v211, 0.35355338
      %v231 = vpack.c.bf16 %v230, %v230
      %v232 = vpack.c.bf16 %v211, %v211
      %234 = vrot.lane.b32.xlu0 %v232, 96
      %v235 = vpop.permute.xlu0 %234
      %vm236 = vcmask 64512
      %v238 = vsel %vm236, %v231, 0
      %v241 = vsel %vm236, %v235, 0
      %243 = vmatprep.subr.bf16.mxu0 0
      %244 = vmatpush1.bf16.xpose.msra.mxu0 0
      %245 = vmatprep.subr.bf16.mxu0 0
      %246 = vmatpush1.bf16.xpose.msra.mxu0 0
      %247 = vmatprep.subr.bf16.mxu0 0
      %248 = vmatpush1.bf16.xpose.msra.mxu0 0
      %249 = vmatprep.subr.bf16.mxu0 0
      %250 = vmatpush1.bf16.xpose.msra.mxu0 0
      %251 = vmatprep.subr.bf16.mxu0 0
      %252 = vmatpush1.bf16.xpose.msra.mxu0 0
      %253 = vmatprep.subr.bf16.mxu0 0
      %254 = vmatpush1.bf16.xpose.msra.mxu0 0
      %255 = vmatprep.subr.bf16.mxu0 0
      %256 = vmatpush1.bf16.xpose.msra.mxu0 0
      %257 = vmatprep.subr.bf16.mxu0 0
      %258 = vmatpush1.bf16.xpose.msra.mxu0 %v241
      %259 = vmatprep.subr.bf16.mxu0 0
      %260 = vmatpush2.bf16.xpose.msra.mxu0 0
      %261 = vmatprep.subr.bf16.mxu0 0
      %262 = vmatpush2.bf16.xpose.msra.mxu0 0
      %263 = vmatprep.subr.bf16.mxu0 0
      %264 = vmatpush2.bf16.xpose.msra.mxu0 0
      %265 = vmatprep.subr.bf16.mxu0 0
      %266 = vmatpush2.bf16.xpose.msra.mxu0 0
      %267 = vmatprep.subr.bf16.mxu0 0
      %268 = vmatpush2.bf16.xpose.msra.mxu0 0
      %269 = vmatprep.subr.bf16.mxu0 0
      %270 = vmatpush2.bf16.xpose.msra.mxu0 0
      %271 = vmatprep.subr.bf16.mxu0 0
      %272 = vmatpush2.bf16.xpose.msra.mxu0 0
      %273 = vmatprep.subr.bf16.mxu0 0
      %274 = vmatpush2.bf16.xpose.msra.mxu0 0
      %275 = vmatprep.mubr.bf16.mxu0 0
      %276 = vmatmul.mubr.bf16.gmra.mxu0 %v238
      %v277 = vpop.f32.mrf.mxu0
      %v278 = vadd.f32 0.0, %v277
      %v279 = vpop.f32.mrf.mxu0
      %v280 = vpop.f32.mrf.mxu0
      %v281 = vpop.f32.mrf.mxu0
      %282 = vdwg.mxu0
      %v283 = vsel %vm220, -inf, %v278
      %v284 = vsel %vm236, %v283, -inf
      %285 = vmax.xlane.f32.xlu0 %v284
      %v286 = vpop.xlane.xlu0 %285
      %v287 = vsub.f32 %v283, %v286
      %v288 = vmul.f32 %v287, 1.442695
      %v289 = vpow.pop %v288
      %v290 = vsel %vm236, %v289, 0.0
      %291 = vadd.xlane.f32.xlu0 %v290
      %v292 = vpop.xlane.xlu0 %291
      %v293 = vrcp.pop %v292
      %v294 = vmul.f32 %v289, %v293
      %v295 = vpack.c.bf16 %v294, %v294
      %296 = vrot.lane.b32.xlu0 %v232, 64
      %v297 = vpop.permute.xlu0 %296
      %v299 = vsel %vm236, %v295, 0
      %vm301 = vcmask 1043456
      %v303 = vsel %vm301, %v297, 0
      %305 = vmatprep.subr.bf16.mxu0 0
      %306 = vmatpush1.bf16.msra.mxu0 0
      %307 = vmatprep.subr.bf16.mxu0 0
      %308 = vmatpush1.bf16.msra.mxu0 0
      %309 = vmatprep.subr.bf16.mxu0 0
      %310 = vmatpush1.bf16.msra.mxu0 0
      %311 = vmatprep.subr.bf16.mxu0 0
      %312 = vmatpush1.bf16.msra.mxu0 0
      %313 = vmatprep.subr.bf16.mxu0 0
      %314 = vmatpush1.bf16.msra.mxu0 0
      %315 = vmatprep.subr.bf16.mxu0 0
      %316 = vmatpush1.bf16.msra.mxu0 0
      %317 = vmatprep.subr.bf16.mxu0 0
      %318 = vmatpush1.bf16.msra.mxu0 0
      %319 = vmatprep.subr.bf16.mxu0 0
      %320 = vmatpush1.bf16.msra.mxu0 %v303
      %321 = vmatprep.subr.bf16.mxu0 0
      %322 = vmatpush2.bf16.msra.mxu0 0
      %323 = vmatprep.subr.bf16.mxu0 0
      %324 = vmatpush2.bf16.msra.mxu0 0
      %325 = vmatprep.subr.bf16.mxu0 0
      %326 = vmatpush2.bf16.msra.mxu0 0
      %327 = vmatprep.subr.bf16.mxu0 0
      %328 = vmatpush2.bf16.msra.mxu0 0
      %329 = vmatprep.subr.bf16.mxu0 0
      %330 = vmatpush2.bf16.msra.mxu0 0
      %331 = vmatprep.subr.bf16.mxu0 0
      %332 = vmatpush2.bf16.msra.mxu0 0
      %333 = vmatprep.subr.bf16.mxu0 0
      %334 = vmatpush2.bf16.msra.mxu0 0
      %335 = vmatprep.subr.bf16.mxu0 0
      %336 = vmatpush2.bf16.msra.mxu0 0
      %337 = vmatprep.mubr.bf16.mxu0 0
      %338 = vmatmul.mubr.bf16.gmra.mxu0 %v299
      %v339 = vpop.f32.mrf.mxu0
      %v340 = vadd.f32 0.0, %v339
      %v341 = vpop.f32.mrf.mxu0
      %v342 = vpop.f32.mrf.mxu0
      %v343 = vpop.f32.mrf.mxu0
      %344 = vdwg.mxu0
      %v345 = vpack.c.bf16 %v340, %v340
      %v347 = vsel %vm236, %v345, 0
      %v350 = vsel %vm301, %v212, 0
      %352 = vmatprep.subr.bf16.mxu0 0
      %353 = vmatpush1.bf16.msra.mxu0 0
      %354 = vmatprep.subr.bf16.mxu0 0
      %355 = vmatpush1.bf16.msra.mxu0 0
      %356 = vmatprep.subr.bf16.mxu0 0
      %357 = vmatpush1.bf16.msra.mxu0 0
      %358 = vmatprep.subr.bf16.mxu0 0
      %359 = vmatpush1.bf16.msra.mxu0 0
      %360 = vmatprep.subr.bf16.mxu0 0
      %361 = vmatpush1.bf16.msra.mxu0 0
      %362 = vmatprep.subr.bf16.mxu0 0
      %363 = vmatpush1.bf16.msra.mxu0 0
      %364 = vmatprep.subr.bf16.mxu0 0
      %365 = vmatpush1.bf16.msra.mxu0 0
      %366 = vmatprep.subr.bf16.mxu0 0
      %367 = vmatpush1.bf16.msra.mxu0 %v350
      %368 = vmatprep.subr.bf16.mxu0 0
      %369 = vmatpush2.bf16.msra.mxu0 0
      %370 = vmatprep.subr.bf16.mxu0 0
      %371 = vmatpush2.bf16.msra.mxu0 0
      %372 = vmatprep.subr.bf16.mxu0 0
      %373 = vmatpush2.bf16.msra.mxu0 0
      %374 = vmatprep.subr.bf16.mxu0 0
      %375 = vmatpush2.bf16.msra.mxu0 0
      %376 = vmatprep.subr.bf16.mxu0 0
      %377 = vmatpush2.bf16.msra.mxu0 0
      %378 = vmatprep.subr.bf16.mxu0 0
      %379 = vmatpush2.bf16.msra.mxu0 0
      %380 = vmatprep.subr.bf16.mxu0 0
      %381 = vmatpush2.bf16.msra.mxu0 0
      %382 = vmatprep.subr.bf16.mxu0 0
      %383 = vmatpush2.bf16.msra.mxu0 0
      %384 = vmatprep.mubr.bf16.mxu0 0
      %385 = vmatmul.mubr.bf16.gmra.mxu0 %v347
      %v386 = vpop.f32.mrf.mxu0
      %v387 = vadd.f32 0.0, %v386
      %v388 = vpop.f32.mrf.mxu0
      %v389 = vpop.f32.mrf.mxu0
      %v390 = vpop.f32.mrf.mxu0
      %391 = vdwg.mxu0
      %v392 = vadd.f32 %v229, %v387
      %394 = vrot.lane.b32.xlu0 %v231, 120
      %v395 = vpop.permute.xlu0 %394
      %396 = vrot.lane.b32.xlu0 %v232, 88
      %v397 = vpop.permute.xlu0 %396
      %v399 = vsel %vm236, %v395, 0
      %v402 = vsel %vm236, %v397, 0
      %404 = vmatprep.subr.bf16.mxu0 0
      %405 = vmatpush1.bf16.xpose.msra.mxu0 0
      %406 = vmatprep.subr.bf16.mxu0 0
      %407 = vmatpush1.bf16.xpose.msra.mxu0 0
      %408 = vmatprep.subr.bf16.mxu0 0
      %409 = vmatpush1.bf16.xpose.msra.mxu0 0
      %410 = vmatprep.subr.bf16.mxu0 0
      %411 = vmatpush1.bf16.xpose.msra.mxu0 0
      %412 = vmatprep.subr.bf16.mxu0 0
      %413 = vmatpush1.bf16.xpose.msra.mxu0 0
      %414 = vmatprep.subr.bf16.mxu0 0
      %415 = vmatpush1.bf16.xpose.msra.mxu0 0
      %416 = vmatprep.subr.bf16.mxu0 0
      %417 = vmatpush1.bf16.xpose.msra.mxu0 0
      %418 = vmatprep.subr.bf16.mxu0 0
      %419 = vmatpush1.bf16.xpose.msra.mxu0 %v402
      %420 = vmatprep.subr.bf16.mxu0 0
      %421 = vmatpush2.bf16.xpose.msra.mxu0 0
      %422 = vmatprep.subr.bf16.mxu0 0
      %423 = vmatpush2.bf16.xpose.msra.mxu0 0
      %424 = vmatprep.subr.bf16.mxu0 0
      %425 = vmatpush2.bf16.xpose.msra.mxu0 0
      %426 = vmatprep.subr.bf16.mxu0 0
      %427 = vmatpush2.bf16.xpose.msra.mxu0 0
      %428 = vmatprep.subr.bf16.mxu0 0
      %429 = vmatpush2.bf16.xpose.msra.mxu0 0
      %430 = vmatprep.subr.bf16.mxu0 0
      %431 = vmatpush2.bf16.xpose.msra.mxu0 0
      %432 = vmatprep.subr.bf16.mxu0 0
      %433 = vmatpush2.bf16.xpose.msra.mxu0 0
      %434 = vmatprep.subr.bf16.mxu0 0
      %435 = vmatpush2.bf16.xpose.msra.mxu0 0
      %436 = vmatprep.mubr.bf16.mxu0 0
      %437 = vmatmul.mubr.bf16.gmra.mxu0 %v399
      %v438 = vpop.f32.mrf.mxu0
      %v439 = vadd.f32 0.0, %v438
      %v440 = vpop.f32.mrf.mxu0
      %v441 = vpop.f32.mrf.mxu0
      %v442 = vpop.f32.mrf.mxu0
      %443 = vdwg.mxu0
      %v444 = vsel %vm220, -inf, %v439
      %v445 = vsel %vm236, %v444, -inf
      %446 = vmax.xlane.f32.xlu0 %v445
      %v447 = vpop.xlane.xlu0 %446
      %v448 = vsub.f32 %v444, %v447
      %v449 = vmul.f32 %v448, 1.442695
      %v450 = vpow.pop %v449
      %v451 = vsel %vm236, %v450, 0.0
      %452 = vadd.xlane.f32.xlu0 %v451
      %v453 = vpop.xlane.xlu0 %452
      %v454 = vrcp.pop %v453
      %v455 = vmul.f32 %v450, %v454
      %v456 = vpack.c.bf16 %v455, %v455
      %457 = vrot.lane.b32.xlu0 %v232, 56
      %v458 = vpop.permute.xlu0 %457
      %v460 = vsel %vm236, %v456, 0
      %v463 = vsel %vm301, %v458, 0
      %465 = vmatprep.subr.bf16.mxu0 0
      %466 = vmatpush1.bf16.msra.mxu0 0
      %467 = vmatprep.subr.bf16.mxu0 0
      %468 = vmatpush1.bf16.msra.mxu0 0
      %469 = vmatprep.subr.bf16.mxu0 0
      %470 = vmatpush1.bf16.msra.mxu0 0
      %471 = vmatprep.subr.bf16.mxu0 0
      %472 = vmatpush1.bf16.msra.mxu0 0
      %473 = vmatprep.subr.bf16.mxu0 0
      %474 = vmatpush1.bf16.msra.mxu0 0
      %475 = vmatprep.subr.bf16.mxu0 0
      %476 = vmatpush1.bf16.msra.mxu0 0
      %477 = vmatprep.subr.bf16.mxu0 0
      %478 = vmatpush1.bf16.msra.mxu0 0
      %479 = vmatprep.subr.bf16.mxu0 0
      %480 = vmatpush1.bf16.msra.mxu0 %v463
      %481 = vmatprep.subr.bf16.mxu0 0
      %482 = vmatpush2.bf16.msra.mxu0 0
      %483 = vmatprep.subr.bf16.mxu0 0
      %484 = vmatpush2.bf16.msra.mxu0 0
      %485 = vmatprep.subr.bf16.mxu0 0
      %486 = vmatpush2.bf16.msra.mxu0 0
      %487 = vmatprep.subr.bf16.mxu0 0
      %488 = vmatpush2.bf16.msra.mxu0 0
      %489 = vmatprep.subr.bf16.mxu0 0
      %490 = vmatpush2.bf16.msra.mxu0 0
      %491 = vmatprep.subr.bf16.mxu0 0
      %492 = vmatpush2.bf16.msra.mxu0 0
      %493 = vmatprep.subr.bf16.mxu0 0
      %494 = vmatpush2.bf16.msra.mxu0 0
      %495 = vmatprep.subr.bf16.mxu0 0
      %496 = vmatpush2.bf16.msra.mxu0 0
      %497 = vmatprep.mubr.bf16.mxu0 0
      %498 = vmatmul.mubr.bf16.gmra.mxu0 %v460
      %v499 = vpop.f32.mrf.mxu0
      %v500 = vadd.f32 0.0, %v499
      %v501 = vpop.f32.mrf.mxu0
      %v502 = vpop.f32.mrf.mxu0
      %v503 = vpop.f32.mrf.mxu0
      %504 = vdwg.mxu0
      %v505 = vpack.c.bf16 %v500, %v500
      %v507 = vsel %vm236, %v505, 0
      %v510 = vsel %vm301, %v213, 0
      %512 = vmatprep.subr.bf16.mxu0 0
      %513 = vmatpush1.bf16.msra.mxu0 0
      %514 = vmatprep.subr.bf16.mxu0 0
      %515 = vmatpush1.bf16.msra.mxu0 0
      %516 = vmatprep.subr.bf16.mxu0 0
      %517 = vmatpush1.bf16.msra.mxu0 0
      %518 = vmatprep.subr.bf16.mxu0 0
      %519 = vmatpush1.bf16.msra.mxu0 0
      %520 = vmatprep.subr.bf16.mxu0 0
      %521 = vmatpush1.bf16.msra.mxu0 0
      %522 = vmatprep.subr.bf16.mxu0 0
      %523 = vmatpush1.bf16.msra.mxu0 0
      %524 = vmatprep.subr.bf16.mxu0 0
      %525 = vmatpush1.bf16.msra.mxu0 0
      %526 = vmatprep.subr.bf16.mxu0 0
      %527 = vmatpush1.bf16.msra.mxu0 %v510
      %528 = vmatprep.subr.bf16.mxu0 0
      %529 = vmatpush2.bf16.msra.mxu0 0
      %530 = vmatprep.subr.bf16.mxu0 0
      %531 = vmatpush2.bf16.msra.mxu0 0
      %532 = vmatprep.subr.bf16.mxu0 0
      %533 = vmatpush2.bf16.msra.mxu0 0
      %534 = vmatprep.subr.bf16.mxu0 0
      %535 = vmatpush2.bf16.msra.mxu0 0
      %536 = vmatprep.subr.bf16.mxu0 0
      %537 = vmatpush2.bf16.msra.mxu0 0
      %538 = vmatprep.subr.bf16.mxu0 0
      %539 = vmatpush2.bf16.msra.mxu0 0
      %540 = vmatprep.subr.bf16.mxu0 0
      %541 = vmatpush2.bf16.msra.mxu0 0
      %542 = vmatprep.subr.bf16.mxu0 0
      %543 = vmatpush2.bf16.msra.mxu0 0
      %544 = vmatprep.mubr.bf16.mxu0 0
      %545 = vmatmul.mubr.bf16.gmra.mxu0 %v507
      %v546 = vpop.f32.mrf.mxu0
      %v547 = vadd.f32 0.0, %v546
      %v548 = vpop.f32.mrf.mxu0
      %v549 = vpop.f32.mrf.mxu0
      %v550 = vpop.f32.mrf.mxu0
      %551 = vdwg.mxu0
      %v552 = vadd.f32 %v392, %v547
      %553 = vrot.lane.b32.xlu0 %v231, 112
      %v554 = vpop.permute.xlu0 %553
      %555 = vrot.lane.b32.xlu0 %v232, 80
      %v556 = vpop.permute.xlu0 %555
      %v558 = vsel %vm236, %v554, 0
      %v561 = vsel %vm236, %v556, 0
      %563 = vmatprep.subr.bf16.mxu0 0
      %564 = vmatpush1.bf16.xpose.msra.mxu0 0
      %565 = vmatprep.subr.bf16.mxu0 0
      %566 = vmatpush1.bf16.xpose.msra.mxu0 0
      %567 = vmatprep.subr.bf16.mxu0 0
      %568 = vmatpush1.bf16.xpose.msra.mxu0 0
      %569 = vmatprep.subr.bf16.mxu0 0
      %570 = vmatpush1.bf16.xpose.msra.mxu0 0
      %571 = vmatprep.subr.bf16.mxu0 0
      %572 = vmatpush1.bf16.xpose.msra.mxu0 0
      %573 = vmatprep.subr.bf16.mxu0 0
      %574 = vmatpush1.bf16.xpose.msra.mxu0 0
      %575 = vmatprep.subr.bf16.mxu0 0
      %576 = vmatpush1.bf16.xpose.msra.mxu0 0
      %577 = vmatprep.subr.bf16.mxu0 0
      %578 = vmatpush1.bf16.xpose.msra.mxu0 %v561
      %579 = vmatprep.subr.bf16.mxu0 0
      %580 = vmatpush2.bf16.xpose.msra.mxu0 0
      %581 = vmatprep.subr.bf16.mxu0 0
      %582 = vmatpush2.bf16.xpose.msra.mxu0 0
      %583 = vmatprep.subr.bf16.mxu0 0
      %584 = vmatpush2.bf16.xpose.msra.mxu0 0
      %585 = vmatprep.subr.bf16.mxu0 0
      %586 = vmatpush2.bf16.xpose.msra.mxu0 0
      %587 = vmatprep.subr.bf16.mxu0 0
      %588 = vmatpush2.bf16.xpose.msra.mxu0 0
      %589 = vmatprep.subr.bf16.mxu0 0
      %590 = vmatpush2.bf16.xpose.msra.mxu0 0
      %591 = vmatprep.subr.bf16.mxu0 0
      %592 = vmatpush2.bf16.xpose.msra.mxu0 0
      %593 = vmatprep.subr.bf16.mxu0 0
      %594 = vmatpush2.bf16.xpose.msra.mxu0 0
      %595 = vmatprep.mubr.bf16.mxu0 0
      %596 = vmatmul.mubr.bf16.gmra.mxu0 %v558
      %v597 = vpop.f32.mrf.mxu0
      %v598 = vadd.f32 0.0, %v597
      %v599 = vpop.f32.mrf.mxu0
      %v600 = vpop.f32.mrf.mxu0
      %v601 = vpop.f32.mrf.mxu0
      %602 = vdwg.mxu0
      %v603 = vsel %vm220, -inf, %v598
      %v604 = vsel %vm236, %v603, -inf
      %605 = vmax.xlane.f32.xlu0 %v604
      %v606 = vpop.xlane.xlu0 %605
      %v607 = vsub.f32 %v603, %v606
      %v608 = vmul.f32 %v607, 1.442695
      %v609 = vpow.pop %v608
      %v610 = vsel %vm236, %v609, 0.0
      %611 = vadd.xlane.f32.xlu0 %v610
      %v612 = vpop.xlane.xlu0 %611
      %v613 = vrcp.pop %v612
      %v614 = vmul.f32 %v609, %v613
      %v615 = vpack.c.bf16 %v614, %v614
      %616 = vrot.lane.b32.xlu0 %v232, 48
      %v617 = vpop.permute.xlu0 %616
      %v619 = vsel %vm236, %v615, 0
      %v622 = vsel %vm301, %v617, 0
      %624 = vmatprep.subr.bf16.mxu0 0
      %625 = vmatpush1.bf16.msra.mxu0 0
      %626 = vmatprep.subr.bf16.mxu0 0
      %627 = vmatpush1.bf16.msra.mxu0 0
      %628 = vmatprep.subr.bf16.mxu0 0
      %629 = vmatpush1.bf16.msra.mxu0 0
      %630 = vmatprep.subr.bf16.mxu0 0
      %631 = vmatpush1.bf16.msra.mxu0 0
      %632 = vmatprep.subr.bf16.mxu0 0
      %633 = vmatpush1.bf16.msra.mxu0 0
      %634 = vmatprep.subr.bf16.mxu0 0
      %635 = vmatpush1.bf16.msra.mxu0 0
      %636 = vmatprep.subr.bf16.mxu0 0
      %637 = vmatpush1.bf16.msra.mxu0 0
      %638 = vmatprep.subr.bf16.mxu0 0
      %639 = vmatpush1.bf16.msra.mxu0 %v622
      %640 = vmatprep.subr.bf16.mxu0 0
      %641 = vmatpush2.bf16.msra.mxu0 0
      %642 = vmatprep.subr.bf16.mxu0 0
      %643 = vmatpush2.bf16.msra.mxu0 0
      %644 = vmatprep.subr.bf16.mxu0 0
      %645 = vmatpush2.bf16.msra.mxu0 0
      %646 = vmatprep.subr.bf16.mxu0 0
      %647 = vmatpush2.bf16.msra.mxu0 0
      %648 = vmatprep.subr.bf16.mxu0 0
      %649 = vmatpush2.bf16.msra.mxu0 0
      %650 = vmatprep.subr.bf16.mxu0 0
      %651 = vmatpush2.bf16.msra.mxu0 0
      %652 = vmatprep.subr.bf16.mxu0 0
      %653 = vmatpush2.bf16.msra.mxu0 0
      %654 = vmatprep.subr.bf16.mxu0 0
      %655 = vmatpush2.bf16.msra.mxu0 0
      %656 = vmatprep.mubr.bf16.mxu0 0
      %657 = vmatmul.mubr.bf16.gmra.mxu0 %v619
      %v658 = vpop.f32.mrf.mxu0
      %v659 = vadd.f32 0.0, %v658
      %v660 = vpop.f32.mrf.mxu0
      %v661 = vpop.f32.mrf.mxu0
      %v662 = vpop.f32.mrf.mxu0
      %663 = vdwg.mxu0
      %v664 = vpack.c.bf16 %v659, %v659
      %v666 = vsel %vm236, %v664, 0
      %v669 = vsel %vm301, %v214, 0
      %671 = vmatprep.subr.bf16.mxu0 0
      %672 = vmatpush1.bf16.msra.mxu0 0
      %673 = vmatprep.subr.bf16.mxu0 0
      %674 = vmatpush1.bf16.msra.mxu0 0
      %675 = vmatprep.subr.bf16.mxu0 0
      %676 = vmatpush1.bf16.msra.mxu0 0
      %677 = vmatprep.subr.bf16.mxu0 0
      %678 = vmatpush1.bf16.msra.mxu0 0
      %679 = vmatprep.subr.bf16.mxu0 0
      %680 = vmatpush1.bf16.msra.mxu0 0
      %681 = vmatprep.subr.bf16.mxu0 0
      %682 = vmatpush1.bf16.msra.mxu0 0
      %683 = vmatprep.subr.bf16.mxu0 0
      %684 = vmatpush1.bf16.msra.mxu0 0
      %685 = vmatprep.subr.bf16.mxu0 0
      %686 = vmatpush1.bf16.msra.mxu0 %v669
      %687 = vmatprep.subr.bf16.mxu0 0
      %688 = vmatpush2.bf16.msra.mxu0 0
      %689 = vmatprep.subr.bf16.mxu0 0
      %690 = vmatpush2.bf16.msra.mxu0 0
      %691 = vmatprep.subr.bf16.mxu0 0
      %692 = vmatpush2.bf16.msra.mxu0 0
      %693 = vmatprep.subr.bf16.mxu0 0
      %694 = vmatpush2.bf16.msra.mxu0 0
      %695 = vmatprep.subr.bf16.mxu0 0
      %696 = vmatpush2.bf16.msra.mxu0 0
      %697 = vmatprep.subr.bf16.mxu0 0
      %698 = vmatpush2.bf16.msra.mxu0 0
      %699 = vmatprep.subr.bf16.mxu0 0
      %700 = vmatpush2.bf16.msra.mxu0 0
      %701 = vmatprep.subr.bf16.mxu0 0
      %702 = vmatpush2.bf16.msra.mxu0 0
      %703 = vmatprep.mubr.bf16.mxu0 0
      %704 = vmatmul.mubr.bf16.gmra.mxu0 %v666
      %v705 = vpop.f32.mrf.mxu0
      %v706 = vadd.f32 0.0, %v705
      %v707 = vpop.f32.mrf.mxu0
      %v708 = vpop.f32.mrf.mxu0
      %v709 = vpop.f32.mrf.mxu0
      %710 = vdwg.mxu0
      %v711 = vadd.f32 %v552, %v706
      %712 = vrot.lane.b32.xlu0 %v231, 104
      %v713 = vpop.permute.xlu0 %712
      %714 = vrot.lane.b32.xlu0 %v232, 72
      %v715 = vpop.permute.xlu0 %714
      %v717 = vsel %vm236, %v713, 0
      %v720 = vsel %vm236, %v715, 0
      %722 = vmatprep.subr.bf16.mxu0 0
      %723 = vmatpush1.bf16.xpose.msra.mxu0 0
      %724 = vmatprep.subr.bf16.mxu0 0
      %725 = vmatpush1.bf16.xpose.msra.mxu0 0
      %726 = vmatprep.subr.bf16.mxu0 0
      %727 = vmatpush1.bf16.xpose.msra.mxu0 0
      %728 = vmatprep.subr.bf16.mxu0 0
      %729 = vmatpush1.bf16.xpose.msra.mxu0 0
      %730 = vmatprep.subr.bf16.mxu0 0
      %731 = vmatpush1.bf16.xpose.msra.mxu0 0
      %732 = vmatprep.subr.bf16.mxu0 0
      %733 = vmatpush1.bf16.xpose.msra.mxu0 0
      %734 = vmatprep.subr.bf16.mxu0 0
      %735 = vmatpush1.bf16.xpose.msra.mxu0 0
      %736 = vmatprep.subr.bf16.mxu0 0
      %737 = vmatpush1.bf16.xpose.msra.mxu0 %v720
      %738 = vmatprep.subr.bf16.mxu0 0
      %739 = vmatpush2.bf16.xpose.msra.mxu0 0
      %740 = vmatprep.subr.bf16.mxu0 0
      %741 = vmatpush2.bf16.xpose.msra.mxu0 0
      %742 = vmatprep.subr.bf16.mxu0 0
      %743 = vmatpush2.bf16.xpose.msra.mxu0 0
      %744 = vmatprep.subr.bf16.mxu0 0
      %745 = vmatpush2.bf16.xpose.msra.mxu0 0
      %746 = vmatprep.subr.bf16.mxu0 0
      %747 = vmatpush2.bf16.xpose.msra.mxu0 0
      %748 = vmatprep.subr.bf16.mxu0 0
      %749 = vmatpush2.bf16.xpose.msra.mxu0 0
      %750 = vmatprep.subr.bf16.mxu0 0
      %751 = vmatpush2.bf16.xpose.msra.mxu0 0
      %752 = vmatprep.subr.bf16.mxu0 0
      %753 = vmatpush2.bf16.xpose.msra.mxu0 0
      %754 = vmatprep.mubr.bf16.mxu0 0
      %755 = vmatmul.mubr.bf16.gmra.mxu0 %v717
      %v756 = vpop.f32.mrf.mxu0
      %v757 = vadd.f32 0.0, %v756
      %v758 = vpop.f32.mrf.mxu0
      %v759 = vpop.f32.mrf.mxu0
      %v760 = vpop.f32.mrf.mxu0
      %761 = vdwg.mxu0
      %v762 = vsel %vm220, -inf, %v757
      %v763 = vsel %vm236, %v762, -inf
      %764 = vmax.xlane.f32.xlu0 %v763
      %v765 = vpop.xlane.xlu0 %764
      %v766 = vsub.f32 %v762, %v765
      %v767 = vmul.f32 %v766, 1.442695
      %v768 = vpow.pop %v767
      %v769 = vsel %vm236, %v768, 0.0
      %770 = vadd.xlane.f32.xlu0 %v769
      %v771 = vpop.xlane.xlu0 %770
      %v772 = vrcp.pop %v771
      %v773 = vmul.f32 %v768, %v772
      %v774 = vpack.c.bf16 %v773, %v773
      %775 = vrot.lane.b32.xlu0 %v232, 40
      %v776 = vpop.permute.xlu0 %775
      %v778 = vsel %vm236, %v774, 0
      %v781 = vsel %vm301, %v776, 0
      %783 = vmatprep.subr.bf16.mxu0 0
      %784 = vmatpush1.bf16.msra.mxu0 0
      %785 = vmatprep.subr.bf16.mxu0 0
      %786 = vmatpush1.bf16.msra.mxu0 0
      %787 = vmatprep.subr.bf16.mxu0 0
      %788 = vmatpush1.bf16.msra.mxu0 0
      %789 = vmatprep.subr.bf16.mxu0 0
      %790 = vmatpush1.bf16.msra.mxu0 0
      %791 = vmatprep.subr.bf16.mxu0 0
      %792 = vmatpush1.bf16.msra.mxu0 0
      %793 = vmatprep.subr.bf16.mxu0 0
      %794 = vmatpush1.bf16.msra.mxu0 0
      %795 = vmatprep.subr.bf16.mxu0 0
      %796 = vmatpush1.bf16.msra.mxu0 0
      %797 = vmatprep.subr.bf16.mxu0 0
      %798 = vmatpush1.bf16.msra.mxu0 %v781
      %799 = vmatprep.subr.bf16.mxu0 0
      %800 = vmatpush2.bf16.msra.mxu0 0
      %801 = vmatprep.subr.bf16.mxu0 0
      %802 = vmatpush2.bf16.msra.mxu0 0
      %803 = vmatprep.subr.bf16.mxu0 0
      %804 = vmatpush2.bf16.msra.mxu0 0
      %805 = vmatprep.subr.bf16.mxu0 0
      %806 = vmatpush2.bf16.msra.mxu0 0
      %807 = vmatprep.subr.bf16.mxu0 0
      %808 = vmatpush2.bf16.msra.mxu0 0
      %809 = vmatprep.subr.bf16.mxu0 0
      %810 = vmatpush2.bf16.msra.mxu0 0
      %811 = vmatprep.subr.bf16.mxu0 0
      %812 = vmatpush2.bf16.msra.mxu0 0
      %813 = vmatprep.subr.bf16.mxu0 0
      %814 = vmatpush2.bf16.msra.mxu0 0
      %815 = vmatprep.mubr.bf16.mxu0 0
      %816 = vmatmul.mubr.bf16.gmra.mxu0 %v778
      %v817 = vpop.f32.mrf.mxu0
      %v818 = vadd.f32 0.0, %v817
      %v819 = vpop.f32.mrf.mxu0
      %v820 = vpop.f32.mrf.mxu0
      %v821 = vpop.f32.mrf.mxu0
      %822 = vdwg.mxu0
      %v823 = vpack.c.bf16 %v818, %v818
      %v825 = vsel %vm236, %v823, 0
      %v828 = vsel %vm301, %v215, 0
      %830 = vmatprep.subr.bf16.mxu0 0
      %831 = vmatpush1.bf16.msra.mxu0 0
      %832 = vmatprep.subr.bf16.mxu0 0
      %833 = vmatpush1.bf16.msra.mxu0 0
      %834 = vmatprep.subr.bf16.mxu0 0
      %835 = vmatpush1.bf16.msra.mxu0 0
      %836 = vmatprep.subr.bf16.mxu0 0
      %837 = vmatpush1.bf16.msra.mxu0 0
      %838 = vmatprep.subr.bf16.mxu0 0
      %839 = vmatpush1.bf16.msra.mxu0 0
      %840 = vmatprep.subr.bf16.mxu0 0
      %841 = vmatpush1.bf16.msra.mxu0 0
      %842 = vmatprep.subr.bf16.mxu0 0
      %843 = vmatpush1.bf16.msra.mxu0 0
      %844 = vmatprep.subr.bf16.mxu0 0
      %845 = vmatpush1.bf16.msra.mxu0 %v828
      %846 = vmatprep.subr.bf16.mxu0 0
      %847 = vmatpush2.bf16.msra.mxu0 0
      %848 = vmatprep.subr.bf16.mxu0 0
      %849 = vmatpush2.bf16.msra.mxu0 0
      %850 = vmatprep.subr.bf16.mxu0 0
      %851 = vmatpush2.bf16.msra.mxu0 0
      %852 = vmatprep.subr.bf16.mxu0 0
      %853 = vmatpush2.bf16.msra.mxu0 0
      %854 = vmatprep.subr.bf16.mxu0 0
      %855 = vmatpush2.bf16.msra.mxu0 0
      %856 = vmatprep.subr.bf16.mxu0 0
      %857 = vmatpush2.bf16.msra.mxu0 0
      %858 = vmatprep.subr.bf16.mxu0 0
      %859 = vmatpush2.bf16.msra.mxu0 0
      %860 = vmatprep.subr.bf16.mxu0 0
      %861 = vmatpush2.bf16.msra.mxu0 0
      %862 = vmatprep.mubr.bf16.mxu0 0
      %863 = vmatmul.mubr.bf16.gmra.mxu0 %v825
      %v864 = vpop.f32.mrf.mxu0
      %v865 = vadd.f32 0.0, %v864
      %v866 = vpop.f32.mrf.mxu0
      %v867 = vpop.f32.mrf.mxu0
      %v868 = vpop.f32.mrf.mxu0
      %869 = vdwg.mxu0
      %v870 = vadd.f32 %v711, %v865
      %vm871 = vcmask 261120
      %872 = vst.msk [vmem:[%s209] sm:$0xff] %vm871, %v870
      %p873 = scmp.lt.s32.totalorder %s15, 1
      %s874 = scalar_select %p873, %s15, 1
      %s875 = smul.addr %s874, 8
      %s876 = scalar_lea.vmem %s4, %s875
      // Predicated region
      $region37: #{_lambda_.8} parent=35 // pred_check
        %p877 = pneg %p127
      $region38: #{_lambda_.8} parent=35 // pred_check_branch
        %879 = sbr.rel (%p877) target = $region40
      $region39: #{_lambda_.8} parent=35 // pred_region
        _
      $region40: #{_lambda_.8} parent=35 // pred_fallthru
        _
    $region36: #{_lambda_.8} parent=5 // pred_fallthru
      _
    %p880 = scmp.le.s32.totalorder 2, %s10
    // Predicated region
    $region41: #{_lambda_.8} parent=5 // pred_check
      %p881 = pneg %p880
    $region42: #{_lambda_.8} parent=5 // pred_check_branch
      %883 = sbr.rel (%p881) target = $region44
    $region43: #{_lambda_.8} parent=5 // pred_region
      %s884 = ssub.s32 %s10, 2
      // Predicated region
      $region45: #{_lambda_.8} parent=43 // pred_check
        %p885 = pneg %p133
      $region46: #{_lambda_.8} parent=43 // pred_check_branch
        %887 = sbr.rel (%p885) target = $region48
      $region47: #{_lambda_.8} parent=43 // pred_region
        %p888 = scmp.lt.s32.totalorder %s16, 1
        %s889 = scalar_select %p888, %s16, 1
        %s890 = smul.addr %s889, 8
        %s891 = scalar_lea.vmem %s4, %s890
      $region48: #{_lambda_.8} parent=43 // pred_fallthru
        _
    $region44: #{_lambda_.8} parent=5 // pred_fallthru
      _
  $region6: #{_lambda_.8} parent=0 // loop_footer
    %s14 = sadd.s32 1, %s10
  $region7: #{_lambda_.8} parent=0 // loop_footer_branch
    %9 = sbr.rel target = $region3
  $region8: #{_lambda_.8} parent=0 // loop_exit
    _

</llo_original>
